<compile_context>
chip_gen: v7x
topology: tpu7x:2x2x1
jax: 0.10.0
libtpu: 0.0.40
codegen_flags: <defaults>
</compile_context>

<pallas_src>
import functools
import math

import jax
import jax.numpy as jnp
from jax.experimental import pallas as pl
from jax.experimental.pallas import tpu as pltpu

_LN_EPS = 1e-6
_GELU_C = math.sqrt(2.0 / math.pi)


def _layernorm(v):
    # LayerNorm(elementwise_affine=False, eps=1e-6) over the last axis, f32.
    mu = jnp.mean(v, axis=-1, keepdims=True)
    d = v - mu
    var = jnp.mean(d * d, axis=-1, keepdims=True)
    return d * jax.lax.rsqrt(var + _LN_EPS)


def tdformer_block_kernel(x_ref, mod_ref,
                          w_qkv_ref, b_qkv_ref,
                          w_proj_ref, b_proj_ref,
                          w_fc1_ref, b_fc1_ref,
                          w_fc2_ref, b_fc2_ref,
                          out_ref, att_sc_ref,
                          *, num_heads, mlp_chunk):
    # x_ref:   (1, N, H) f32        mod_ref: (1, 6, H) f32
    # w_qkv:   (H, 3H) bf16         w_proj: (H, H) bf16
    # w_fc1:   (H, MH) bf16         w_fc2:  (MH, H) bf16     biases: f32
    # att_sc_ref: (N, H) bf16 VMEM scratch (per-head outputs, pre-projection)
    N = x_ref.shape[1]
    H = x_ref.shape[2]
    MH = w_fc1_ref.shape[1]
    hd = H // num_heads

    x = x_ref[0]                      # (N, H) f32
    mod = mod_ref[0]                  # (6, H) f32
    shift_msa = mod[0:1, :]
    scale_msa = mod[1:2, :]
    gate_msa = mod[2:3, :]
    shift_mlp = mod[3:4, :]
    scale_mlp = mod[4:5, :]
    gate_mlp = mod[5:6, :]

    # ---- attention branch ----------------------------------------------------
    xm = _layernorm(x) * (1.0 + scale_msa) + shift_msa            # (N, H) f32
    qkv = jnp.dot(xm.astype(jnp.bfloat16), w_qkv_ref[...],
                  preferred_element_type=jnp.float32)
    qkv = qkv + b_qkv_ref[...]                                    # (N, 3H) f32
    # 1/sqrt(hd) was folded into the q columns of w_qkv/b_qkv in the wrapper.
    q = qkv[:, 0:H].astype(jnp.bfloat16)
    k = qkv[:, H:2 * H].astype(jnp.bfloat16)
    v = qkv[:, 2 * H:3 * H].astype(jnp.bfloat16)

    for h in range(num_heads):
        sl = slice(h * hd, (h + 1) * hd)
        qh = q[:, sl]
        kh = k[:, sl]
        vh = v[:, sl]
        # scores: contract last dims directly (no materialized k.T)
        s = jax.lax.dot_general(qh, kh, (((1,), (1,)), ((), ())),
                                preferred_element_type=jnp.float32)   # (N, N)
        s = s - jnp.max(s, axis=-1, keepdims=True)
        p = jnp.exp(s)
        denom = jnp.sum(p, axis=-1, keepdims=True)                    # (N, 1)
        oh = jnp.dot(p.astype(jnp.bfloat16), vh,
                     preferred_element_type=jnp.float32)              # (N, hd)
        # fold softmax denominator via EUP reciprocal (separate VLIW slot)
        oh = oh * pl.reciprocal(denom, approx=True)
        att_sc_ref[:, sl] = oh.astype(jnp.bfloat16)

    # single full-K output projection (heads "concatenated" via scratch stores)
    att = jnp.dot(att_sc_ref[...], w_proj_ref[...],
                  preferred_element_type=jnp.float32)
    att = att + b_proj_ref[...]                                       # (N, H) f32

    x1 = x + gate_msa * att                                           # gated residual

    # ---- MLP branch (chunked over MH so h1/gelu never fully materialize) -----
    xm2 = _layernorm(x1) * (1.0 + scale_mlp) + shift_mlp
    xm2_b = xm2.astype(jnp.bfloat16)
    h2 = jnp.zeros((N, H), jnp.float32)
    for c0 in range(0, MH, mlp_chunk):
        c1 = min(c0 + mlp_chunk, MH)
        h1 = jnp.dot(xm2_b, w_fc1_ref[:, c0:c1],
                     preferred_element_type=jnp.float32)
        h1 = h1 + b_fc1_ref[:, c0:c1]                                 # (N, chunk) f32
        g = 0.5 * h1 * (1.0 + jnp.tanh(_GELU_C * (h1 + 0.044715 * h1 * h1 * h1)))
        h2 = h2 + jnp.dot(g.astype(jnp.bfloat16), w_fc2_ref[c0:c1, :],
                          preferred_element_type=jnp.float32)
    h2 = h2 + b_fc2_ref[...]                                          # (N, H) f32

    out_ref[0] = (x1 + gate_mlp * h2).astype(out_ref.dtype)


def tdformer_block_forward(x, c, params, *, num_heads, mlp_chunk=512):
    """x: (B, N, H) f32, c: (B, H) f32 -> (B, N, H) f32."""
    B, N, H = x.shape
    MH = params["w_fc1"].shape[1]
    assert H % num_heads == 0, "hidden_size must be divisible by num_heads"
    hd = H // num_heads
    scale = 1.0 / math.sqrt(hd)
    mlp_chunk = min(mlp_chunk, MH)

    # ---- adaLN hoisted out of the kernel (tiny matvec; frees VMEM) -----------
    c_act = c * jax.nn.sigmoid(c)
    ada = c_act @ params["w_ada"] + params["b_ada"]                   # (B, 6H) f32
    mod = ada.reshape(B, 6, H)                                        # chunk order == slices of H

    # ---- fold attention scale into q weight/bias, cast weights to bf16 -------
    qcol_scale = jnp.concatenate([jnp.full((H,), scale, jnp.float32),
                                  jnp.ones((2 * H,), jnp.float32)])
    w_qkv = (params["w_qkv"] * qcol_scale[None, :]).astype(jnp.bfloat16)
    b_qkv = params["b_qkv"] * qcol_scale[None, :]                     # bias stays f32
    w_proj = params["w_proj"].astype(jnp.bfloat16)
    w_fc1 = params["w_fc1"].astype(jnp.bfloat16)
    w_fc2 = params["w_fc2"].astype(jnp.bfloat16)

    kernel = functools.partial(tdformer_block_kernel,
                               num_heads=num_heads, mlp_chunk=mlp_chunk)
    const2d = lambda b: (0, 0)  # weights/biases stay VMEM-resident across grid steps

    # ---- explicit VMEM budget (resident weights + live intermediates) --------
    weight_bytes = 2 * (H * 3 * H + H * H + H * MH + MH * H)          # bf16
    bias_bytes = 4 * (3 * H + H + MH + H)
    act_bytes = 4 * (2 * 2 * N * H        # x/out blocks, double-buffered
                     + 2 * 6 * H          # modulation block
                     + N * 3 * H          # qkv
                     + 2 * N * N          # scores + probs (per-head live)
                     + 2 * N * mlp_chunk  # h1 + gelu chunk
                     + N * H)             # attention scratch / accumulators
    vmem_limit = int(min(64 << 20,        # safe on all of v5e/v6e/v7x
                         max(32 << 20,
                             2 * (2 * weight_bytes + bias_bytes + act_bytes))))

    flops = B * (2 * N * H * 3 * H        # qkv
                 + 4 * N * N * H          # scores + PV
                 + 2 * N * H * H          # output projection
                 + 2 * N * H * MH         # fc1
                 + 2 * N * MH * H)        # fc2
    transcendentals = B * (num_heads * N * N + N * MH + num_heads * N)
    bytes_accessed = (weight_bytes + bias_bytes
                      + 4 * (2 * x.size + mod.size))

    return pl.pallas_call(
        kernel,
        out_shape=jax.ShapeDtypeStruct((B, N, H), jnp.float32),
        grid_spec=pltpu.PrefetchScalarGridSpec(
            num_scalar_prefetch=0,
            grid=(B,),
            in_specs=[
                pl.BlockSpec((1, N, H), lambda b: (b, 0, 0)),         # x
                pl.BlockSpec((1, 6, H), lambda b: (b, 0, 0)),         # modulation
                pl.BlockSpec((H, 3 * H), const2d),                    # w_qkv (bf16)
                pl.BlockSpec((1, 3 * H), const2d),                    # b_qkv (f32)
                pl.BlockSpec((H, H), const2d),                        # w_proj (bf16)
                pl.BlockSpec((1, H), const2d),                        # b_proj (f32)
                pl.BlockSpec((H, MH), const2d),                       # w_fc1 (bf16)
                pl.BlockSpec((1, MH), const2d),                       # b_fc1 (f32)
                pl.BlockSpec((MH, H), const2d),                       # w_fc2 (bf16)
                pl.BlockSpec((1, H), const2d),                        # b_fc2 (f32)
            ],
            out_specs=pl.BlockSpec((1, N, H), lambda b: (b, 0, 0)),
            scratch_shapes=[pltpu.VMEM((N, H), jnp.bfloat16)],
        ),
        compiler_params=pltpu.CompilerParams(
            dimension_semantics=("parallel",),
            vmem_limit_bytes=vmem_limit),
        cost_estimate=pl.CostEstimate(flops=flops,
                                      transcendentals=transcendentals,
                                      bytes_accessed=bytes_accessed),
    )(x, mod,
      w_qkv, b_qkv,
      w_proj, params["b_proj"],
      w_fc1, params["b_fc1"],
      w_fc2, params["b_fc2"])


# ----------------------------- reference & init --------------------------------
def tdformer_block_ref(x, c, params, *, num_heads):
    B, N, H = x.shape
    hd = H // num_heads

    def layernorm(v):
        mu = jnp.mean(v, axis=-1, keepdims=True)
        var = jnp.mean((v - mu) ** 2, axis=-1, keepdims=True)
        return (v - mu) / jnp.sqrt(var + _LN_EPS)

    silu_c = c * (1.0 / (1.0 + jnp.exp(-c)))
    ada = silu_c @ params["w_ada"] + params["b_ada"]
    (shift_msa, scale_msa, gate_msa,
     shift_mlp, scale_mlp, gate_mlp) = jnp.split(ada, 6, axis=1)

    xm = layernorm(x) * (1.0 + scale_msa[:, None, :]) + shift_msa[:, None, :]
    qkv = xm @ params["w_qkv"] + params["b_qkv"]
    q, k, v = jnp.split(qkv, 3, axis=-1)
    to_heads = lambda t: t.reshape(B, N, num_heads, hd).transpose(0, 2, 1, 3)
    qh, kh, vh = to_heads(q), to_heads(k), to_heads(v)
    s = jnp.einsum("bhqd,bhkd->bhqk", qh, kh) / math.sqrt(hd)
    p = jax.nn.softmax(s, axis=-1)
    o = jnp.einsum("bhqk,bhkd->bhqd", p, vh).transpose(0, 2, 1, 3).reshape(B, N, H)
    o = o @ params["w_proj"] + params["b_proj"]
    x = x + gate_msa[:, None, :] * o

    xm2 = layernorm(x) * (1.0 + scale_mlp[:, None, :]) + shift_mlp[:, None, :]
    h1 = xm2 @ params["w_fc1"] + params["b_fc1"]
    g = 0.5 * h1 * (1.0 + jnp.tanh(_GELU_C * (h1 + 0.044715 * h1 ** 3)))
    h2 = g @ params["w_fc2"] + params["b_fc2"]
    return x + gate_mlp[:, None, :] * h2


def init_params(key, hidden, mlp_hidden):
    # nn.Linear default init, weights stored as (in, out).
    def linear(k, fan_in, fan_out):
        k1, k2 = jax.random.split(k)
        lim = 1.0 / math.sqrt(fan_in)
        w = jax.random.uniform(k1, (fan_in, fan_out), jnp.float32, -lim, lim)
        b = jax.random.uniform(k2, (1, fan_out), jnp.float32, -lim, lim)
        return w, b

    ks = jax.random.split(key, 5)
    w_ada, b_ada = linear(ks[0], hidden, 6 * hidden)
    w_qkv, b_qkv = linear(ks[1], hidden, 3 * hidden)
    w_proj, b_proj = linear(ks[2], hidden, hidden)
    w_fc1, b_fc1 = linear(ks[3], hidden, mlp_hidden)
    w_fc2, b_fc2 = linear(ks[4], mlp_hidden, hidden)
    return dict(w_ada=w_ada, b_ada=b_ada, w_qkv=w_qkv, b_qkv=b_qkv,
                w_proj=w_proj, b_proj=b_proj, w_fc1=w_fc1, b_fc1=b_fc1,
                w_fc2=w_fc2, b_fc2=b_fc2)


if __name__ == "__main__":
    # Small correctness shapes (perf tuning should be done at H % 128 == 0 etc.)
    B, N, H, HEADS, MLP_RATIO = 2, 8, 32, 4, 4.0
    MH = int(H * MLP_RATIO)

    key = jax.random.PRNGKey(0)
    kx, kc, kp = jax.random.split(key, 3)
    x = jax.random.normal(kx, (B, N, H), jnp.float32)
    c = jax.random.normal(kc, (B, H), jnp.float32)
    params = init_params(kp, H, MH)

    out = tdformer_block_forward(x, c, params, num_heads=HEADS)
    out = jax.block_until_ready(out)

    ref = tdformer_block_ref(x, c, params, num_heads=HEADS)
    assert out.shape == (B, N, H)
    max_err = float(jnp.max(jnp.abs(out - ref)))
    # bf16 matmul path + approx reciprocal: tolerance loosened vs. the f32 version.
    assert jnp.allclose(out, ref, atol=5e-2, rtol=5e-2), max_err

    print("KERNEL_OK")
</pallas_src>

<mosaic_0001>
module attributes {stable_mosaic.version = 11 : i64} {
  func.func @tdformer_block_kernel(%arg0: i32, %arg1: memref<1x8x32xf32, #tpu.memory_space<vmem>>, %arg2: memref<1x6x32xf32, #tpu.memory_space<vmem>>, %arg3: memref<32x96xbf16, #tpu.memory_space<vmem>>, %arg4: memref<1x96xf32, #tpu.memory_space<vmem>>, %arg5: memref<32x32xbf16, #tpu.memory_space<vmem>>, %arg6: memref<1x32xf32, #tpu.memory_space<vmem>>, %arg7: memref<32x128xbf16, #tpu.memory_space<vmem>>, %arg8: memref<1x128xf32, #tpu.memory_space<vmem>>, %arg9: memref<128x32xbf16, #tpu.memory_space<vmem>>, %arg10: memref<1x32xf32, #tpu.memory_space<vmem>>, %arg11: memref<1x8x32xf32, #tpu.memory_space<vmem>>, %arg12: memref<8x32xbf16, #tpu.memory_space<vmem>>) attributes {dimension_semantics = [#tpu.dimension_semantics<parallel>], iteration_bounds = array<i64: 2>, scalar_prefetch = 0 : i64, scratch_operands = 1 : i64, tpu.core_type = #tpu.core_type<tc>, window_params = [{transform_indices = @transform_0, window_bounds = array<i64: 1, 8, 32>}, {transform_indices = @transform_1, window_bounds = array<i64: 1, 6, 32>}, {pipeline_mode = #tpu.pipeline_mode<synchronous>, transform_indices = @transform_2, window_bounds = array<i64: 32, 96>}, {pipeline_mode = #tpu.pipeline_mode<synchronous>, transform_indices = @transform_3, window_bounds = array<i64: 1, 96>}, {pipeline_mode = #tpu.pipeline_mode<synchronous>, transform_indices = @transform_4, window_bounds = array<i64: 32, 32>}, {pipeline_mode = #tpu.pipeline_mode<synchronous>, transform_indices = @transform_5, window_bounds = array<i64: 1, 32>}, {pipeline_mode = #tpu.pipeline_mode<synchronous>, transform_indices = @transform_6, window_bounds = array<i64: 32, 128>}, {pipeline_mode = #tpu.pipeline_mode<synchronous>, transform_indices = @transform_7, window_bounds = array<i64: 1, 128>}, {pipeline_mode = #tpu.pipeline_mode<synchronous>, transform_indices = @transform_8, window_bounds = array<i64: 128, 32>}, {pipeline_mode = #tpu.pipeline_mode<synchronous>, transform_indices = @transform_9, window_bounds = array<i64: 1, 32>}, {transform_indices = @transform_10, window_bounds = array<i64: 1, 8, 32>}]} {
    %c0 = arith.constant 0 : index
    %c0_0 = arith.constant 0 : index
    %c0_1 = arith.constant 0 : index
    %0 = vector.load %arg1[%c0, %c0_0, %c0_1] : memref<1x8x32xf32, #tpu.memory_space<vmem>>, vector<1x8x32xf32>
    %1 = vector.shape_cast %0 : vector<1x8x32xf32> to vector<8x32xf32>
    %c0_2 = arith.constant 0 : index
    %c0_3 = arith.constant 0 : index
    %c0_4 = arith.constant 0 : index
    %2 = vector.load %arg2[%c0_2, %c0_3, %c0_4] : memref<1x6x32xf32, #tpu.memory_space<vmem>>, vector<1x6x32xf32>
    %3 = vector.shape_cast %2 : vector<1x6x32xf32> to vector<6x32xf32>
    %4 = vector.extract_strided_slice %3 {offsets = [0, 0], sizes = [1, 32], strides = [1, 1]} : vector<6x32xf32> to vector<1x32xf32>
    %5 = vector.extract_strided_slice %3 {offsets = [1, 0], sizes = [1, 32], strides = [1, 1]} : vector<6x32xf32> to vector<1x32xf32>
    %6 = vector.extract_strided_slice %3 {offsets = [2, 0], sizes = [1, 32], strides = [1, 1]} : vector<6x32xf32> to vector<1x32xf32>
    %7 = vector.extract_strided_slice %3 {offsets = [3, 0], sizes = [1, 32], strides = [1, 1]} : vector<6x32xf32> to vector<1x32xf32>
    %8 = vector.extract_strided_slice %3 {offsets = [4, 0], sizes = [1, 32], strides = [1, 1]} : vector<6x32xf32> to vector<1x32xf32>
    %9 = vector.extract_strided_slice %3 {offsets = [5, 0], sizes = [1, 32], strides = [1, 1]} : vector<6x32xf32> to vector<1x32xf32>
    %cst = arith.constant dense<0.000000e+00> : vector<8xf32>
    %10 = vector.multi_reduction <add>, %1, %cst [1] : vector<8x32xf32> to vector<8xf32>
    %11 = vector.shape_cast %10 : vector<8xf32> to vector<8x1xf32>
    %cst_5 = arith.constant 3.200000e+01 : f32
    %12 = vector.broadcast %cst_5 : f32 to vector<8x1xf32>
    %13 = arith.divf %11, %12 : vector<8x1xf32>
    %14 = vector.broadcast %13 : vector<8x1xf32> to vector<8x32xf32>
    %15 = arith.subf %1, %14 : vector<8x32xf32>
    %16 = arith.mulf %15, %15 : vector<8x32xf32>
    %cst_6 = arith.constant dense<0.000000e+00> : vector<8xf32>
    %17 = vector.multi_reduction <add>, %16, %cst_6 [1] : vector<8x32xf32> to vector<8xf32>
    %18 = vector.shape_cast %17 : vector<8xf32> to vector<8x1xf32>
    %cst_7 = arith.constant 3.200000e+01 : f32
    %19 = vector.broadcast %cst_7 : f32 to vector<8x1xf32>
    %20 = arith.divf %18, %19 : vector<8x1xf32>
    %cst_8 = arith.constant 9.99999997E-7 : f32
    %21 = vector.broadcast %cst_8 : f32 to vector<8x1xf32>
    %22 = arith.addf %20, %21 : vector<8x1xf32>
    %23 = math.rsqrt %22 : vector<8x1xf32>
    %24 = vector.broadcast %23 : vector<8x1xf32> to vector<8x32xf32>
    %25 = arith.mulf %15, %24 : vector<8x32xf32>
    %cst_9 = arith.constant 1.000000e+00 : f32
    %26 = vector.broadcast %cst_9 : f32 to vector<1x32xf32>
    %27 = arith.addf %26, %5 : vector<1x32xf32>
    %28 = vector.broadcast %27 : vector<1x32xf32> to vector<8x32xf32>
    %29 = arith.mulf %25, %28 : vector<8x32xf32>
    %30 = vector.broadcast %4 : vector<1x32xf32> to vector<8x32xf32>
    %31 = arith.addf %29, %30 : vector<8x32xf32>
    %32 = arith.truncf %31 : vector<8x32xf32> to vector<8x32xbf16>
    %c0_10 = arith.constant 0 : index
    %c0_11 = arith.constant 0 : index
    %33 = vector.load %arg3[%c0_10, %c0_11] : memref<32x96xbf16, #tpu.memory_space<vmem>>, vector<32x96xbf16>
    %cst_12 = arith.constant dense<0.000000e+00> : vector<8x96xf32>
    %34 = tpu.matmul %32, %33, %cst_12 {dimension_numbers = #tpu.dot_dimension_numbers<[1], [0], [0], [1], [0, 0, 1, 1], [], []>} : vector<8x32xbf16>, vector<32x96xbf16>, vector<8x96xf32> -> vector<8x96xf32>
    %c0_13 = arith.constant 0 : index
    %c0_14 = arith.constant 0 : index
    %35 = vector.load %arg4[%c0_13, %c0_14] : memref<1x96xf32, #tpu.memory_space<vmem>>, vector<1x96xf32>
    %36 = vector.broadcast %35 : vector<1x96xf32> to vector<8x96xf32>
    %37 = arith.addf %34, %36 : vector<8x96xf32>
    %38 = vector.extract_strided_slice %37 {offsets = [0, 0], sizes = [8, 32], strides = [1, 1]} : vector<8x96xf32> to vector<8x32xf32>
    %39 = arith.truncf %38 : vector<8x32xf32> to vector<8x32xbf16>
    %40 = vector.extract_strided_slice %37 {offsets = [0, 32], sizes = [8, 32], strides = [1, 1]} : vector<8x96xf32> to vector<8x32xf32>
    %41 = arith.truncf %40 : vector<8x32xf32> to vector<8x32xbf16>
    %42 = vector.extract_strided_slice %37 {offsets = [0, 64], sizes = [8, 32], strides = [1, 1]} : vector<8x96xf32> to vector<8x32xf32>
    %43 = arith.truncf %42 : vector<8x32xf32> to vector<8x32xbf16>
    %44 = vector.extract_strided_slice %39 {offsets = [0, 0], sizes = [8, 8], strides = [1, 1]} : vector<8x32xbf16> to vector<8x8xbf16>
    %45 = vector.extract_strided_slice %41 {offsets = [0, 0], sizes = [8, 8], strides = [1, 1]} : vector<8x32xbf16> to vector<8x8xbf16>
    %46 = vector.extract_strided_slice %43 {offsets = [0, 0], sizes = [8, 8], strides = [1, 1]} : vector<8x32xbf16> to vector<8x8xbf16>
    %cst_15 = arith.constant dense<0.000000e+00> : vector<8x8xf32>
    %47 = tpu.matmul %44, %45, %cst_15 {dimension_numbers = #tpu.dot_dimension_numbers<[1], [1], [0], [0], [0, 0, 1, 0], [], []>} : vector<8x8xbf16>, vector<8x8xbf16>, vector<8x8xf32> -> vector<8x8xf32>
    %cst_16 = arith.constant dense<0xFF800000> : vector<8xf32>
    %48 = vector.multi_reduction <maximumf>, %47, %cst_16 [1] : vector<8x8xf32> to vector<8xf32>
    %49 = vector.shape_cast %48 : vector<8xf32> to vector<8x1xf32>
    %50 = vector.broadcast %49 : vector<8x1xf32> to vector<8x8xf32>
    %51 = arith.subf %47, %50 : vector<8x8xf32>
    %52 = math.exp %51 : vector<8x8xf32>
    %cst_17 = arith.constant dense<0.000000e+00> : vector<8xf32>
    %53 = vector.multi_reduction <add>, %52, %cst_17 [1] : vector<8x8xf32> to vector<8xf32>
    %54 = vector.shape_cast %53 : vector<8xf32> to vector<8x1xf32>
    %55 = arith.truncf %52 : vector<8x8xf32> to vector<8x8xbf16>
    %cst_18 = arith.constant dense<0.000000e+00> : vector<8x8xf32>
    %56 = tpu.matmul %55, %46, %cst_18 {dimension_numbers = #tpu.dot_dimension_numbers<[1], [0], [0], [1], [0, 0, 1, 1], [], []>} : vector<8x8xbf16>, vector<8x8xbf16>, vector<8x8xf32> -> vector<8x8xf32>
    %57 = tpu.reciprocal %54 {approx = true} : vector<8x1xf32> -> vector<8x1xf32>
    %58 = vector.broadcast %57 : vector<8x1xf32> to vector<8x8xf32>
    %59 = arith.mulf %56, %58 : vector<8x8xf32>
    %60 = arith.truncf %59 : vector<8x8xf32> to vector<8x8xbf16>
    %c0_19 = arith.constant 0 : index
    %c0_20 = arith.constant 0 : index
    %61 = vector.load %arg12[%c0_19, %c0_20] : memref<8x32xbf16, #tpu.memory_space<vmem>>, vector<8x8xbf16>
    tpu.vector_store %arg12[%c0_19, %c0_20], %60 {strides = array<i32>} : memref<8x32xbf16, #tpu.memory_space<vmem>>, vector<8x8xbf16>,
    %62 = vector.extract_strided_slice %39 {offsets = [0, 8], sizes = [8, 8], strides = [1, 1]} : vector<8x32xbf16> to vector<8x8xbf16>
    %63 = vector.extract_strided_slice %41 {offsets = [0, 8], sizes = [8, 8], strides = [1, 1]} : vector<8x32xbf16> to vector<8x8xbf16>
    %64 = vector.extract_strided_slice %43 {offsets = [0, 8], sizes = [8, 8], strides = [1, 1]} : vector<8x32xbf16> to vector<8x8xbf16>
    %cst_21 = arith.constant dense<0.000000e+00> : vector<8x8xf32>
    %65 = tpu.matmul %62, %63, %cst_21 {dimension_numbers = #tpu.dot_dimension_numbers<[1], [1], [0], [0], [0, 0, 1, 0], [], []>} : vector<8x8xbf16>, vector<8x8xbf16>, vector<8x8xf32> -> vector<8x8xf32>
    %cst_22 = arith.constant dense<0xFF800000> : vector<8xf32>
    %66 = vector.multi_reduction <maximumf>, %65, %cst_22 [1] : vector<8x8xf32> to vector<8xf32>
    %67 = vector.shape_cast %66 : vector<8xf32> to vector<8x1xf32>
    %68 = vector.broadcast %67 : vector<8x1xf32> to vector<8x8xf32>
    %69 = arith.subf %65, %68 : vector<8x8xf32>
    %70 = math.exp %69 : vector<8x8xf32>
    %cst_23 = arith.constant dense<0.000000e+00> : vector<8xf32>
    %71 = vector.multi_reduction <add>, %70, %cst_23 [1] : vector<8x8xf32> to vector<8xf32>
    %72 = vector.shape_cast %71 : vector<8xf32> to vector<8x1xf32>
    %73 = arith.truncf %70 : vector<8x8xf32> to vector<8x8xbf16>
    %cst_24 = arith.constant dense<0.000000e+00> : vector<8x8xf32>
    %74 = tpu.matmul %73, %64, %cst_24 {dimension_numbers = #tpu.dot_dimension_numbers<[1], [0], [0], [1], [0, 0, 1, 1], [], []>} : vector<8x8xbf16>, vector<8x8xbf16>, vector<8x8xf32> -> vector<8x8xf32>
    %75 = tpu.reciprocal %72 {approx = true} : vector<8x1xf32> -> vector<8x1xf32>
    %76 = vector.broadcast %75 : vector<8x1xf32> to vector<8x8xf32>
    %77 = arith.mulf %74, %76 : vector<8x8xf32>
    %78 = arith.truncf %77 : vector<8x8xf32> to vector<8x8xbf16>
    %c0_25 = arith.constant 0 : index
    %c8 = arith.constant 8 : index
    %79 = vector.load %arg12[%c0_25, %c8] : memref<8x32xbf16, #tpu.memory_space<vmem>>, vector<8x8xbf16>
    tpu.vector_store %arg12[%c0_25, %c8], %78 {strides = array<i32>} : memref<8x32xbf16, #tpu.memory_space<vmem>>, vector<8x8xbf16>,
    %80 = vector.extract_strided_slice %39 {offsets = [0, 16], sizes = [8, 8], strides = [1, 1]} : vector<8x32xbf16> to vector<8x8xbf16>
    %81 = vector.extract_strided_slice %41 {offsets = [0, 16], sizes = [8, 8], strides = [1, 1]} : vector<8x32xbf16> to vector<8x8xbf16>
    %82 = vector.extract_strided_slice %43 {offsets = [0, 16], sizes = [8, 8], strides = [1, 1]} : vector<8x32xbf16> to vector<8x8xbf16>
    %cst_26 = arith.constant dense<0.000000e+00> : vector<8x8xf32>
    %83 = tpu.matmul %80, %81, %cst_26 {dimension_numbers = #tpu.dot_dimension_numbers<[1], [1], [0], [0], [0, 0, 1, 0], [], []>} : vector<8x8xbf16>, vector<8x8xbf16>, vector<8x8xf32> -> vector<8x8xf32>
    %cst_27 = arith.constant dense<0xFF800000> : vector<8xf32>
    %84 = vector.multi_reduction <maximumf>, %83, %cst_27 [1] : vector<8x8xf32> to vector<8xf32>
    %85 = vector.shape_cast %84 : vector<8xf32> to vector<8x1xf32>
    %86 = vector.broadcast %85 : vector<8x1xf32> to vector<8x8xf32>
    %87 = arith.subf %83, %86 : vector<8x8xf32>
    %88 = math.exp %87 : vector<8x8xf32>
    %cst_28 = arith.constant dense<0.000000e+00> : vector<8xf32>
    %89 = vector.multi_reduction <add>, %88, %cst_28 [1] : vector<8x8xf32> to vector<8xf32>
    %90 = vector.shape_cast %89 : vector<8xf32> to vector<8x1xf32>
    %91 = arith.truncf %88 : vector<8x8xf32> to vector<8x8xbf16>
    %cst_29 = arith.constant dense<0.000000e+00> : vector<8x8xf32>
    %92 = tpu.matmul %91, %82, %cst_29 {dimension_numbers = #tpu.dot_dimension_numbers<[1], [0], [0], [1], [0, 0, 1, 1], [], []>} : vector<8x8xbf16>, vector<8x8xbf16>, vector<8x8xf32> -> vector<8x8xf32>
    %93 = tpu.reciprocal %90 {approx = true} : vector<8x1xf32> -> vector<8x1xf32>
    %94 = vector.broadcast %93 : vector<8x1xf32> to vector<8x8xf32>
    %95 = arith.mulf %92, %94 : vector<8x8xf32>
    %96 = arith.truncf %95 : vector<8x8xf32> to vector<8x8xbf16>
    %c0_30 = arith.constant 0 : index
    %c16 = arith.constant 16 : index
    %97 = vector.load %arg12[%c0_30, %c16] : memref<8x32xbf16, #tpu.memory_space<vmem>>, vector<8x8xbf16>
    tpu.vector_store %arg12[%c0_30, %c16], %96 {strides = array<i32>} : memref<8x32xbf16, #tpu.memory_space<vmem>>, vector<8x8xbf16>,
    %98 = vector.extract_strided_slice %39 {offsets = [0, 24], sizes = [8, 8], strides = [1, 1]} : vector<8x32xbf16> to vector<8x8xbf16>
    %99 = vector.extract_strided_slice %41 {offsets = [0, 24], sizes = [8, 8], strides = [1, 1]} : vector<8x32xbf16> to vector<8x8xbf16>
    %100 = vector.extract_strided_slice %43 {offsets = [0, 24], sizes = [8, 8], strides = [1, 1]} : vector<8x32xbf16> to vector<8x8xbf16>
    %cst_31 = arith.constant dense<0.000000e+00> : vector<8x8xf32>
    %101 = tpu.matmul %98, %99, %cst_31 {dimension_numbers = #tpu.dot_dimension_numbers<[1], [1], [0], [0], [0, 0, 1, 0], [], []>} : vector<8x8xbf16>, vector<8x8xbf16>, vector<8x8xf32> -> vector<8x8xf32>
    %cst_32 = arith.constant dense<0xFF800000> : vector<8xf32>
    %102 = vector.multi_reduction <maximumf>, %101, %cst_32 [1] : vector<8x8xf32> to vector<8xf32>
    %103 = vector.shape_cast %102 : vector<8xf32> to vector<8x1xf32>
    %104 = vector.broadcast %103 : vector<8x1xf32> to vector<8x8xf32>
    %105 = arith.subf %101, %104 : vector<8x8xf32>
    %106 = math.exp %105 : vector<8x8xf32>
    %cst_33 = arith.constant dense<0.000000e+00> : vector<8xf32>
    %107 = vector.multi_reduction <add>, %106, %cst_33 [1] : vector<8x8xf32> to vector<8xf32>
    %108 = vector.shape_cast %107 : vector<8xf32> to vector<8x1xf32>
    %109 = arith.truncf %106 : vector<8x8xf32> to vector<8x8xbf16>
    %cst_34 = arith.constant dense<0.000000e+00> : vector<8x8xf32>
    %110 = tpu.matmul %109, %100, %cst_34 {dimension_numbers = #tpu.dot_dimension_numbers<[1], [0], [0], [1], [0, 0, 1, 1], [], []>} : vector<8x8xbf16>, vector<8x8xbf16>, vector<8x8xf32> -> vector<8x8xf32>
    %111 = tpu.reciprocal %108 {approx = true} : vector<8x1xf32> -> vector<8x1xf32>
    %112 = vector.broadcast %111 : vector<8x1xf32> to vector<8x8xf32>
    %113 = arith.mulf %110, %112 : vector<8x8xf32>
    %114 = arith.truncf %113 : vector<8x8xf32> to vector<8x8xbf16>
    %c0_35 = arith.constant 0 : index
    %c24 = arith.constant 24 : index
    %115 = vector.load %arg12[%c0_35, %c24] : memref<8x32xbf16, #tpu.memory_space<vmem>>, vector<8x8xbf16>
    tpu.vector_store %arg12[%c0_35, %c24], %114 {strides = array<i32>} : memref<8x32xbf16, #tpu.memory_space<vmem>>, vector<8x8xbf16>,
    %c0_36 = arith.constant 0 : index
    %c0_37 = arith.constant 0 : index
    %116 = vector.load %arg12[%c0_36, %c0_37] : memref<8x32xbf16, #tpu.memory_space<vmem>>, vector<8x32xbf16>
    %c0_38 = arith.constant 0 : index
    %c0_39 = arith.constant 0 : index
    %117 = vector.load %arg5[%c0_38, %c0_39] : memref<32x32xbf16, #tpu.memory_space<vmem>>, vector<32x32xbf16>
    %cst_40 = arith.constant dense<0.000000e+00> : vector<8x32xf32>
    %118 = tpu.matmul %116, %117, %cst_40 {dimension_numbers = #tpu.dot_dimension_numbers<[1], [0], [0], [1], [0, 0, 1, 1], [], []>} : vector<8x32xbf16>, vector<32x32xbf16>, vector<8x32xf32> -> vector<8x32xf32>
    %c0_41 = arith.constant 0 : index
    %c0_42 = arith.constant 0 : index
    %119 = vector.load %arg6[%c0_41, %c0_42] : memref<1x32xf32, #tpu.memory_space<vmem>>, vector<1x32xf32>
    %120 = vector.broadcast %119 : vector<1x32xf32> to vector<8x32xf32>
    %121 = arith.addf %118, %120 : vector<8x32xf32>
    %122 = vector.broadcast %6 : vector<1x32xf32> to vector<8x32xf32>
    %123 = arith.mulf %122, %121 : vector<8x32xf32>
    %124 = arith.addf %1, %123 : vector<8x32xf32>
    %cst_43 = arith.constant dense<0.000000e+00> : vector<8xf32>
    %125 = vector.multi_reduction <add>, %124, %cst_43 [1] : vector<8x32xf32> to vector<8xf32>
    %126 = vector.shape_cast %125 : vector<8xf32> to vector<8x1xf32>
    %cst_44 = arith.constant 3.200000e+01 : f32
    %127 = vector.broadcast %cst_44 : f32 to vector<8x1xf32>
    %128 = arith.divf %126, %127 : vector<8x1xf32>
    %129 = vector.broadcast %128 : vector<8x1xf32> to vector<8x32xf32>
    %130 = arith.subf %124, %129 : vector<8x32xf32>
    %131 = arith.mulf %130, %130 : vector<8x32xf32>
    %cst_45 = arith.constant dense<0.000000e+00> : vector<8xf32>
    %132 = vector.multi_reduction <add>, %131, %cst_45 [1] : vector<8x32xf32> to vector<8xf32>
    %133 = vector.shape_cast %132 : vector<8xf32> to vector<8x1xf32>
    %cst_46 = arith.constant 3.200000e+01 : f32
    %134 = vector.broadcast %cst_46 : f32 to vector<8x1xf32>
    %135 = arith.divf %133, %134 : vector<8x1xf32>
    %cst_47 = arith.constant 9.99999997E-7 : f32
    %136 = vector.broadcast %cst_47 : f32 to vector<8x1xf32>
    %137 = arith.addf %135, %136 : vector<8x1xf32>
    %138 = math.rsqrt %137 : vector<8x1xf32>
    %139 = vector.broadcast %138 : vector<8x1xf32> to vector<8x32xf32>
    %140 = arith.mulf %130, %139 : vector<8x32xf32>
    %cst_48 = arith.constant 1.000000e+00 : f32
    %141 = vector.broadcast %cst_48 : f32 to vector<1x32xf32>
    %142 = arith.addf %141, %8 : vector<1x32xf32>
    %143 = vector.broadcast %142 : vector<1x32xf32> to vector<8x32xf32>
    %144 = arith.mulf %140, %143 : vector<8x32xf32>
    %145 = vector.broadcast %7 : vector<1x32xf32> to vector<8x32xf32>
    %146 = arith.addf %144, %145 : vector<8x32xf32>
    %147 = arith.truncf %146 : vector<8x32xf32> to vector<8x32xbf16>
    %cst_49 = arith.constant 0.000000e+00 : f32
    %148 = vector.broadcast %cst_49 : f32 to vector<8x32xf32>
    %c0_50 = arith.constant 0 : index
    %c0_51 = arith.constant 0 : index
    %149 = vector.load %arg7[%c0_50, %c0_51] : memref<32x128xbf16, #tpu.memory_space<vmem>>, vector<32x128xbf16>
    %cst_52 = arith.constant dense<0.000000e+00> : vector<8x128xf32>
    %150 = tpu.matmul %147, %149, %cst_52 {dimension_numbers = #tpu.dot_dimension_numbers<[1], [0], [0], [1], [0, 0, 1, 1], [], []>} : vector<8x32xbf16>, vector<32x128xbf16>, vector<8x128xf32> -> vector<8x128xf32>
    %c0_53 = arith.constant 0 : index
    %c0_54 = arith.constant 0 : index
    %151 = vector.load %arg8[%c0_53, %c0_54] : memref<1x128xf32, #tpu.memory_space<vmem>>, vector<1x128xf32>
    %152 = vector.broadcast %151 : vector<1x128xf32> to vector<8x128xf32>
    %153 = arith.addf %150, %152 : vector<8x128xf32>
    %cst_55 = arith.constant 5.000000e-01 : f32
    %154 = vector.broadcast %cst_55 : f32 to vector<8x128xf32>
    %155 = arith.mulf %154, %153 : vector<8x128xf32>
    %cst_56 = arith.constant 4.471500e-02 : f32
    %156 = vector.broadcast %cst_56 : f32 to vector<8x128xf32>
    %157 = arith.mulf %156, %153 : vector<8x128xf32>
    %158 = arith.mulf %157, %153 : vector<8x128xf32>
    %159 = arith.mulf %158, %153 : vector<8x128xf32>
    %160 = arith.addf %153, %159 : vector<8x128xf32>
    %cst_57 = arith.constant 0.797884583 : f32
    %161 = vector.broadcast %cst_57 : f32 to vector<8x128xf32>
    %162 = arith.mulf %161, %160 : vector<8x128xf32>
    %163 = math.tanh %162 : vector<8x128xf32>
    %cst_58 = arith.constant 1.000000e+00 : f32
    %164 = vector.broadcast %cst_58 : f32 to vector<8x128xf32>
    %165 = arith.addf %164, %163 : vector<8x128xf32>
    %166 = arith.mulf %155, %165 : vector<8x128xf32>
    %167 = arith.truncf %166 : vector<8x128xf32> to vector<8x128xbf16>
    %c0_59 = arith.constant 0 : index
    %c0_60 = arith.constant 0 : index
    %168 = vector.load %arg9[%c0_59, %c0_60] : memref<128x32xbf16, #tpu.memory_space<vmem>>, vector<128x32xbf16>
    %cst_61 = arith.constant dense<0.000000e+00> : vector<8x32xf32>
    %169 = tpu.matmul %167, %168, %cst_61 {dimension_numbers = #tpu.dot_dimension_numbers<[1], [0], [0], [1], [0, 0, 1, 1], [], []>} : vector<8x128xbf16>, vector<128x32xbf16>, vector<8x32xf32> -> vector<8x32xf32>
    %170 = arith.addf %148, %169 : vector<8x32xf32>
    %c0_62 = arith.constant 0 : index
    %c0_63 = arith.constant 0 : index
    %171 = vector.load %arg10[%c0_62, %c0_63] : memref<1x32xf32, #tpu.memory_space<vmem>>, vector<1x32xf32>
    %172 = vector.broadcast %171 : vector<1x32xf32> to vector<8x32xf32>
    %173 = arith.addf %170, %172 : vector<8x32xf32>
    %174 = vector.broadcast %9 : vector<1x32xf32> to vector<8x32xf32>
    %175 = arith.mulf %174, %173 : vector<8x32xf32>
    %176 = arith.addf %124, %175 : vector<8x32xf32>
    %c0_64 = arith.constant 0 : index
    %c0_65 = arith.constant 0 : index
    %c0_66 = arith.constant 0 : index
    %177 = vector.load %arg11[%c0_64, %c0_65, %c0_66] : memref<1x8x32xf32, #tpu.memory_space<vmem>>, vector<1x8x32xf32>
    %178 = vector.shape_cast %177 : vector<1x8x32xf32> to vector<8x32xf32>
    %179 = vector.shape_cast %176 : vector<8x32xf32> to vector<1x8x32xf32>
    tpu.vector_store %arg11[%c0_64, %c0_65, %c0_66], %179 {strides = array<i32>} : memref<1x8x32xf32, #tpu.memory_space<vmem>>, vector<1x8x32xf32>,
    return
  }
  func.func @transform_0(%arg0: i32) -> (i32, i32, i32) {
    %c0_i32 = arith.constant 0 : i32
    %c0_i32_0 = arith.constant 0 : i32
    %c0_i32_1 = arith.constant 0 : i32
    return %arg0, %c0_i32, %c0_i32_0 : i32, i32, i32
  }
  func.func @transform_1(%arg0: i32) -> (i32, i32, i32) {
    %c0_i32 = arith.constant 0 : i32
    %c0_i32_0 = arith.constant 0 : i32
    %c0_i32_1 = arith.constant 0 : i32
    return %arg0, %c0_i32, %c0_i32_0 : i32, i32, i32
  }
  func.func @transform_2(%arg0: i32) -> (i32, i32) {
    %c0_i32 = arith.constant 0 : i32
    %c0_i32_0 = arith.constant 0 : i32
    %c0_i32_1 = arith.constant 0 : i32
    return %c0_i32, %c0_i32_0 : i32, i32
  }
  func.func @transform_3(%arg0: i32) -> (i32, i32) {
    %c0_i32 = arith.constant 0 : i32
    %c0_i32_0 = arith.constant 0 : i32
    %c0_i32_1 = arith.constant 0 : i32
    return %c0_i32, %c0_i32_0 : i32, i32
  }
  func.func @transform_4(%arg0: i32) -> (i32, i32) {
    %c0_i32 = arith.constant 0 : i32
    %c0_i32_0 = arith.constant 0 : i32
    %c0_i32_1 = arith.constant 0 : i32
    return %c0_i32, %c0_i32_0 : i32, i32
  }
  func.func @transform_5(%arg0: i32) -> (i32, i32) {
    %c0_i32 = arith.constant 0 : i32
    %c0_i32_0 = arith.constant 0 : i32
    %c0_i32_1 = arith.constant 0 : i32
    return %c0_i32, %c0_i32_0 : i32, i32
  }
  func.func @transform_6(%arg0: i32) -> (i32, i32) {
    %c0_i32 = arith.constant 0 : i32
    %c0_i32_0 = arith.constant 0 : i32
    %c0_i32_1 = arith.constant 0 : i32
    return %c0_i32, %c0_i32_0 : i32, i32
  }
  func.func @transform_7(%arg0: i32) -> (i32, i32) {
    %c0_i32 = arith.constant 0 : i32
    %c0_i32_0 = arith.constant 0 : i32
    %c0_i32_1 = arith.constant 0 : i32
    return %c0_i32, %c0_i32_0 : i32, i32
  }
  func.func @transform_8(%arg0: i32) -> (i32, i32) {
    %c0_i32 = arith.constant 0 : i32
    %c0_i32_0 = arith.constant 0 : i32
    %c0_i32_1 = arith.constant 0 : i32
    return %c0_i32, %c0_i32_0 : i32, i32
  }
  func.func @transform_9(%arg0: i32) -> (i32, i32) {
    %c0_i32 = arith.constant 0 : i32
    %c0_i32_0 = arith.constant 0 : i32
    %c0_i32_1 = arith.constant 0 : i32
    return %c0_i32, %c0_i32_0 : i32, i32
  }
  func.func @transform_10(%arg0: i32) -> (i32, i32, i32) {
    %c0_i32 = arith.constant 0 : i32
    %c0_i32_0 = arith.constant 0 : i32
    %c0_i32_1 = arith.constant 0 : i32
    return %arg0, %c0_i32, %c0_i32_0 : i32, i32, i32
  }
}

</mosaic_0001>

<llo_original>
// kernel: tpu_custom_call.1
$region0: #{tpu_custom_call.1}
  #allocation0 [shape = 'u32[]', space=smem, size = 0x4, offset = 0x4, fixed_abs, tag = 'smem constant byte address 0x4 - core index']
  #allocation1 [shape = 'u32[144,128]{1,0:T(1,128)}', space=vmem, size = 0x12000, scoped, tag = 'internal scratch']
  #allocation2 [shape = 'bf16[8,32]{1,0:T(8,128)(2,1)}', space=vmem, size = 0x800, scoped, tag = 'scratch operand']
  %s0 = inlined_call_operand.vmem [shape: f32[2,8,32], index: 0, kind: input, shape index: {}]
  %s1 = inlined_call_operand.vmem [shape: f32[2,6,32], index: 1, kind: input, shape index: {}]
  %s2 = inlined_call_operand.vmem [shape: bf16[32,96], index: 2, kind: input, shape index: {}]
  %s3 = inlined_call_operand.vmem [shape: f32[1,96], index: 3, kind: input, shape index: {}]
  %s4 = inlined_call_operand.vmem [shape: bf16[32,32], index: 4, kind: input, shape index: {}]
  %s5 = inlined_call_operand.vmem [shape: f32[1,32], index: 5, kind: input, shape index: {}]
  %s6 = inlined_call_operand.vmem [shape: bf16[32,128], index: 6, kind: input, shape index: {}]
  %s7 = inlined_call_operand.vmem [shape: f32[1,128], index: 7, kind: input, shape index: {}]
  %s8 = inlined_call_operand.vmem [shape: bf16[128,32], index: 8, kind: input, shape index: {}]
  %s9 = inlined_call_operand.vmem [shape: f32[1,32], index: 9, kind: input, shape index: {}]
  %s10 = inlined_call_operand.hbm [shape: f32[2,8,32], index: 10, kind: output, shape index: {}]
  %s11 = sld [smem:[#allocation0]]
  $region73: #{tpu_custom_call.1} parent=0
    _
  %s13 = ssub.s32 1, %s11
  %s14 = scalar_select 0, %s13, %s11
  $region1: #{tpu_custom_call.1} parent=0
    #allocation3 [shape = 'u8[8192]{0}', space=vmem, size = 0x2000, scoped, tag = 'output window, operand 0']
    #allocation4 [shape = 's32[2]{0}', space=sflag, size = 0x8, scoped, tag = 'scoped memory for tpu_custom_call.1']
    %15 = vsyncpa [#allocation4], 0
    %s16 = scalar_lea.sflag [#allocation4], 1
    %17 = vsyncpa %s16, 0
    loop: start=0, step=1, limit=4
    $region2: #{tpu_custom_call.1} parent=1 // loop_pre_header
      _
    $region3: #{tpu_custom_call.1} parent=1 // loop_header
      %s19 = sphi 0, %s23
      %p20 = scmp.ge.s32.totalorder %s19, 4
      %s29 = sphi 0, %s31
      %s32 = sphi 0, %s29
      %s33 = sphi 0, %s32
      %s49 = sphi 0, %s33
      %s55 = sphi 0, %s57
      %s58 = sphi 0, %s55
      %s59 = sphi 0, %s58
      %s75 = sphi 0, %s59
      %s79 = sphi 0, %s79
      %s81 = sphi 0, %s79
      %s82 = sphi 0, %s81
      %s96 = sphi 0, %s82
      %s100 = sphi 0, %s100
      %s102 = sphi 0, %s100
      %s103 = sphi 0, %s102
      %s117 = sphi 0, %s103
      %s121 = sphi 0, %s121
      %s123 = sphi 0, %s121
      %s124 = sphi 0, %s123
      %s138 = sphi 0, %s124
      %s142 = sphi 0, %s142
      %s144 = sphi 0, %s142
      %s145 = sphi 0, %s144
      %s159 = sphi 0, %s145
      %s163 = sphi 0, %s163
      %s165 = sphi 0, %s163
      %s166 = sphi 0, %s165
      %s180 = sphi 0, %s166
      %s184 = sphi 0, %s184
      %s186 = sphi 0, %s184
      %s187 = sphi 0, %s186
      %s201 = sphi 0, %s187
      %s205 = sphi 0, %s205
      %s207 = sphi 0, %s205
      %s208 = sphi 0, %s207
      %s222 = sphi 0, %s208
      %s226 = sphi 0, %s226
      %s228 = sphi 0, %s226
      %s229 = sphi 0, %s228
      %s243 = sphi 0, %s229
      %s249 = sphi 0, %s251
      %s252 = sphi 0, %s249
      %s253 = sphi 0, %s252
      %s269 = sphi 0, %s253
    $region4: #{tpu_custom_call.1} parent=1 // loop_header_branch
      %22 = sbr.rel (%p20) target = $region8
    $region5: #{tpu_custom_call.1} parent=1 // loop_body
      %s24 = ssub.s32 %s19, 1
      %s25 = ssub.s32 %s19, 2
      %s26 = sadd.s32 %s19, 1
      %s27 = ssub.s32 %s19, %s26
      %p28 = scmp.eq.s32.totalorder %s27, 0
      %s30 = sadd.s32 %s29, 1
      %s31 = scalar_select %p28, %s29, %s30
      %p34 = pneg %p28
      %p35 = scmp.eq.s32.totalorder %s19, 1
      %p36 = por %p34, %p35
      %p37 = scmp.ne.s32.totalorder %s29, %s32
      %p38 = scmp.eq.s32.totalorder %s19, 0
      %p39 = por %p37, %p38
      %p40 = scmp.ne.s32.totalorder %s29, %s32
      %p41 = scmp.eq.s32.totalorder %s24, 1
      %p42 = por %p40, %p41
      %p43 = scmp.ne.s32.totalorder %s32, %s33
      %p44 = scmp.eq.s32.totalorder %s24, 0
      %p45 = por %p43, %p44
      %p46 = scmp.ne.s32.totalorder %s32, %s33
      %p47 = scmp.eq.s32.totalorder %s25, 1
      %p48 = por %p46, %p47
      %p50 = scmp.ne.s32.totalorder %s33, %s49
      %p51 = scmp.eq.s32.totalorder %s25, 0
      %p52 = por %p50, %p51
      %s53 = ssub.s32 %s19, %s26
      %p54 = scmp.eq.s32.totalorder %s53, 0
      %s56 = sadd.s32 %s55, 1
      %s57 = scalar_select %p54, %s55, %s56
      %p60 = pneg %p54
      %p61 = scmp.eq.s32.totalorder %s19, 1
      %p62 = por %p60, %p61
      %p63 = scmp.ne.s32.totalorder %s55, %s58
      %p64 = scmp.eq.s32.totalorder %s19, 0
      %p65 = por %p63, %p64
      %p66 = scmp.ne.s32.totalorder %s55, %s58
      %p67 = scmp.eq.s32.totalorder %s24, 1
      %p68 = por %p66, %p67
      %p69 = scmp.ne.s32.totalorder %s58, %s59
      %p70 = scmp.eq.s32.totalorder %s24, 0
      %p71 = por %p69, %p70
      %p72 = scmp.ne.s32.totalorder %s58, %s59
      %p73 = scmp.eq.s32.totalorder %s25, 1
      %p74 = por %p72, %p73
      %p76 = scmp.ne.s32.totalorder %s59, %s75
      %p77 = scmp.eq.s32.totalorder %s25, 0
      %p78 = por %p76, %p77
      %s80 = sadd.s32 %s79, 1
      %p83 = scmp.eq.s32.totalorder %s19, 1
      %p84 = scmp.ne.s32.totalorder %s79, %s81
      %p85 = scmp.eq.s32.totalorder %s19, 0
      %p86 = por %p84, %p85
      %p87 = scmp.ne.s32.totalorder %s79, %s81
      %p88 = scmp.eq.s32.totalorder %s24, 1
      %p89 = por %p87, %p88
      %p90 = scmp.ne.s32.totalorder %s81, %s82
      %p91 = scmp.eq.s32.totalorder %s24, 0
      %p92 = por %p90, %p91
      %p93 = scmp.ne.s32.totalorder %s81, %s82
      %p94 = scmp.eq.s32.totalorder %s25, 1
      %p95 = por %p93, %p94
      %p97 = scmp.ne.s32.totalorder %s82, %s96
      %p98 = scmp.eq.s32.totalorder %s25, 0
      %p99 = por %p97, %p98
      %s101 = sadd.s32 %s100, 1
      %p104 = scmp.eq.s32.totalorder %s19, 1
      %p105 = scmp.ne.s32.totalorder %s100, %s102
      %p106 = scmp.eq.s32.totalorder %s19, 0
      %p107 = por %p105, %p106
      %p108 = scmp.ne.s32.totalorder %s100, %s102
      %p109 = scmp.eq.s32.totalorder %s24, 1
      %p110 = por %p108, %p109
      %p111 = scmp.ne.s32.totalorder %s102, %s103
      %p112 = scmp.eq.s32.totalorder %s24, 0
      %p113 = por %p111, %p112
      %p114 = scmp.ne.s32.totalorder %s102, %s103
      %p115 = scmp.eq.s32.totalorder %s25, 1
      %p116 = por %p114, %p115
      %p118 = scmp.ne.s32.totalorder %s103, %s117
      %p119 = scmp.eq.s32.totalorder %s25, 0
      %p120 = por %p118, %p119
      %s122 = sadd.s32 %s121, 1
      %p125 = scmp.eq.s32.totalorder %s19, 1
      %p126 = scmp.ne.s32.totalorder %s121, %s123
      %p127 = scmp.eq.s32.totalorder %s19, 0
      %p128 = por %p126, %p127
      %p129 = scmp.ne.s32.totalorder %s121, %s123
      %p130 = scmp.eq.s32.totalorder %s24, 1
      %p131 = por %p129, %p130
      %p132 = scmp.ne.s32.totalorder %s123, %s124
      %p133 = scmp.eq.s32.totalorder %s24, 0
      %p134 = por %p132, %p133
      %p135 = scmp.ne.s32.totalorder %s123, %s124
      %p136 = scmp.eq.s32.totalorder %s25, 1
      %p137 = por %p135, %p136
      %p139 = scmp.ne.s32.totalorder %s124, %s138
      %p140 = scmp.eq.s32.totalorder %s25, 0
      %p141 = por %p139, %p140
      %s143 = sadd.s32 %s142, 1
      %p146 = scmp.eq.s32.totalorder %s19, 1
      %p147 = scmp.ne.s32.totalorder %s142, %s144
      %p148 = scmp.eq.s32.totalorder %s19, 0
      %p149 = por %p147, %p148
      %p150 = scmp.ne.s32.totalorder %s142, %s144
      %p151 = scmp.eq.s32.totalorder %s24, 1
      %p152 = por %p150, %p151
      %p153 = scmp.ne.s32.totalorder %s144, %s145
      %p154 = scmp.eq.s32.totalorder %s24, 0
      %p155 = por %p153, %p154
      %p156 = scmp.ne.s32.totalorder %s144, %s145
      %p157 = scmp.eq.s32.totalorder %s25, 1
      %p158 = por %p156, %p157
      %p160 = scmp.ne.s32.totalorder %s145, %s159
      %p161 = scmp.eq.s32.totalorder %s25, 0
      %p162 = por %p160, %p161
      %s164 = sadd.s32 %s163, 1
      %p167 = scmp.eq.s32.totalorder %s19, 1
      %p168 = scmp.ne.s32.totalorder %s163, %s165
      %p169 = scmp.eq.s32.totalorder %s19, 0
      %p170 = por %p168, %p169
      %p171 = scmp.ne.s32.totalorder %s163, %s165
      %p172 = scmp.eq.s32.totalorder %s24, 1
      %p173 = por %p171, %p172
      %p174 = scmp.ne.s32.totalorder %s165, %s166
      %p175 = scmp.eq.s32.totalorder %s24, 0
      %p176 = por %p174, %p175
      %p177 = scmp.ne.s32.totalorder %s165, %s166
      %p178 = scmp.eq.s32.totalorder %s25, 1
      %p179 = por %p177, %p178
      %p181 = scmp.ne.s32.totalorder %s166, %s180
      %p182 = scmp.eq.s32.totalorder %s25, 0
      %p183 = por %p181, %p182
      %s185 = sadd.s32 %s184, 1
      %p188 = scmp.eq.s32.totalorder %s19, 1
      %p189 = scmp.ne.s32.totalorder %s184, %s186
      %p190 = scmp.eq.s32.totalorder %s19, 0
      %p191 = por %p189, %p190
      %p192 = scmp.ne.s32.totalorder %s184, %s186
      %p193 = scmp.eq.s32.totalorder %s24, 1
      %p194 = por %p192, %p193
      %p195 = scmp.ne.s32.totalorder %s186, %s187
      %p196 = scmp.eq.s32.totalorder %s24, 0
      %p197 = por %p195, %p196
      %p198 = scmp.ne.s32.totalorder %s186, %s187
      %p199 = scmp.eq.s32.totalorder %s25, 1
      %p200 = por %p198, %p199
      %p202 = scmp.ne.s32.totalorder %s187, %s201
      %p203 = scmp.eq.s32.totalorder %s25, 0
      %p204 = por %p202, %p203
      %s206 = sadd.s32 %s205, 1
      %p209 = scmp.eq.s32.totalorder %s19, 1
      %p210 = scmp.ne.s32.totalorder %s205, %s207
      %p211 = scmp.eq.s32.totalorder %s19, 0
      %p212 = por %p210, %p211
      %p213 = scmp.ne.s32.totalorder %s205, %s207
      %p214 = scmp.eq.s32.totalorder %s24, 1
      %p215 = por %p213, %p214
      %p216 = scmp.ne.s32.totalorder %s207, %s208
      %p217 = scmp.eq.s32.totalorder %s24, 0
      %p218 = por %p216, %p217
      %p219 = scmp.ne.s32.totalorder %s207, %s208
      %p220 = scmp.eq.s32.totalorder %s25, 1
      %p221 = por %p219, %p220
      %p223 = scmp.ne.s32.totalorder %s208, %s222
      %p224 = scmp.eq.s32.totalorder %s25, 0
      %p225 = por %p223, %p224
      %s227 = sadd.s32 %s226, 1
      %p230 = scmp.eq.s32.totalorder %s19, 1
      %p231 = scmp.ne.s32.totalorder %s226, %s228
      %p232 = scmp.eq.s32.totalorder %s19, 0
      %p233 = por %p231, %p232
      %p234 = scmp.ne.s32.totalorder %s226, %s228
      %p235 = scmp.eq.s32.totalorder %s24, 1
      %p236 = por %p234, %p235
      %p237 = scmp.ne.s32.totalorder %s228, %s229
      %p238 = scmp.eq.s32.totalorder %s24, 0
      %p239 = por %p237, %p238
      %p240 = scmp.ne.s32.totalorder %s228, %s229
      %p241 = scmp.eq.s32.totalorder %s25, 1
      %p242 = por %p240, %p241
      %p244 = scmp.ne.s32.totalorder %s229, %s243
      %p245 = scmp.eq.s32.totalorder %s25, 0
      %p246 = por %p244, %p245
      %s247 = ssub.s32 %s19, %s26
      %p248 = scmp.eq.s32.totalorder %s247, 0
      %s250 = sadd.s32 %s249, 1
      %s251 = scalar_select %p248, %s249, %s250
      %p254 = pneg %p248
      %p255 = scmp.eq.s32.totalorder %s19, 1
      %p256 = por %p254, %p255
      %p257 = scmp.ne.s32.totalorder %s249, %s252
      %p258 = scmp.eq.s32.totalorder %s19, 0
      %p259 = por %p257, %p258
      %p260 = scmp.ne.s32.totalorder %s249, %s252
      %p261 = scmp.eq.s32.totalorder %s24, 1
      %p262 = por %p260, %p261
      %p263 = scmp.ne.s32.totalorder %s252, %s253
      %p264 = scmp.eq.s32.totalorder %s24, 0
      %p265 = por %p263, %p264
      %p266 = scmp.ne.s32.totalorder %s252, %s253
      %p267 = scmp.eq.s32.totalorder %s25, 1
      %p268 = por %p266, %p267
      %p270 = scmp.ne.s32.totalorder %s253, %s269
      %p271 = scmp.eq.s32.totalorder %s25, 0
      %p272 = por %p270, %p271
      %p273 = scmp.le.s32.totalorder 1, %s19
      %p274 = scmp.lt.s32.totalorder %s19, 3
      %p275 = pnand %p273, %p274
      %p276 = pneg %p275
      // Predicated region
      $region9: #{tpu_custom_call.1} parent=5 // pred_check
        _
      $region10: #{tpu_custom_call.1} parent=5 // pred_check_branch
        %278 = sbr.rel (%p275) target = $region12
      $region11: #{tpu_custom_call.1} parent=5 // pred_region
        %s279 = ssub.s32 %s19, 1
        // Predicated region
        $region13: #{tpu_custom_call.1} parent=11 // pred_check
          %p280 = pneg %p92
        $region14: #{tpu_custom_call.1} parent=11 // pred_check_branch
          %282 = sbr.rel (%p280) target = $region16
        $region15: #{tpu_custom_call.1} parent=11 // pred_region
          _
        $region16: #{tpu_custom_call.1} parent=11 // pred_fallthru
          _
        // Predicated region
        $region17: #{tpu_custom_call.1} parent=11 // pred_check
          %p283 = pneg %p113
        $region18: #{tpu_custom_call.1} parent=11 // pred_check_branch
          %285 = sbr.rel (%p283) target = $region20
        $region19: #{tpu_custom_call.1} parent=11 // pred_region
          _
        $region20: #{tpu_custom_call.1} parent=11 // pred_fallthru
          _
        // Predicated region
        $region21: #{tpu_custom_call.1} parent=11 // pred_check
          %p286 = pneg %p134
        $region22: #{tpu_custom_call.1} parent=11 // pred_check_branch
          %288 = sbr.rel (%p286) target = $region24
        $region23: #{tpu_custom_call.1} parent=11 // pred_region
          _
        $region24: #{tpu_custom_call.1} parent=11 // pred_fallthru
          _
        // Predicated region
        $region25: #{tpu_custom_call.1} parent=11 // pred_check
          %p289 = pneg %p155
        $region26: #{tpu_custom_call.1} parent=11 // pred_check_branch
          %291 = sbr.rel (%p289) target = $region28
        $region27: #{tpu_custom_call.1} parent=11 // pred_region
          _
        $region28: #{tpu_custom_call.1} parent=11 // pred_fallthru
          _
        // Predicated region
        $region29: #{tpu_custom_call.1} parent=11 // pred_check
          %p292 = pneg %p176
        $region30: #{tpu_custom_call.1} parent=11 // pred_check_branch
          %294 = sbr.rel (%p292) target = $region32
        $region31: #{tpu_custom_call.1} parent=11 // pred_region
          _
        $region32: #{tpu_custom_call.1} parent=11 // pred_fallthru
          _
        // Predicated region
        $region33: #{tpu_custom_call.1} parent=11 // pred_check
          %p295 = pneg %p197
        $region34: #{tpu_custom_call.1} parent=11 // pred_check_branch
          %297 = sbr.rel (%p295) target = $region36
        $region35: #{tpu_custom_call.1} parent=11 // pred_region
          _
        $region36: #{tpu_custom_call.1} parent=11 // pred_fallthru
          _
        // Predicated region
        $region37: #{tpu_custom_call.1} parent=11 // pred_check
          %p298 = pneg %p218
        $region38: #{tpu_custom_call.1} parent=11 // pred_check_branch
          %300 = sbr.rel (%p298) target = $region40
        $region39: #{tpu_custom_call.1} parent=11 // pred_region
          _
        $region40: #{tpu_custom_call.1} parent=11 // pred_fallthru
          _
        // Predicated region
        $region41: #{tpu_custom_call.1} parent=11 // pred_check
          %p301 = pneg %p239
        $region42: #{tpu_custom_call.1} parent=11 // pred_check_branch
          %303 = sbr.rel (%p301) target = $region44
        $region43: #{tpu_custom_call.1} parent=11 // pred_region
          _
        $region44: #{tpu_custom_call.1} parent=11 // pred_fallthru
          _
      $region12: #{tpu_custom_call.1} parent=5 // pred_fallthru
        _
      %p304 = scmp.lt.s32.totalorder %s19, 2
      // Predicated region
      $region45: #{tpu_custom_call.1} parent=5 // pred_check
        %p305 = pneg %p304
      $region46: #{tpu_custom_call.1} parent=5 // pred_check_branch
        %307 = sbr.rel (%p305) target = $region48
      $region47: #{tpu_custom_call.1} parent=5 // pred_region
        // Predicated region
        $region49: #{tpu_custom_call.1} parent=47 // pred_check
          %p308 = pneg %p39
        $region50: #{tpu_custom_call.1} parent=47 // pred_check_branch
          %310 = sbr.rel (%p308) target = $region52
        $region51: #{tpu_custom_call.1} parent=47 // pred_region
          %p311 = scmp.lt.s32.totalorder %s19, 1
          %s312 = scalar_select %p311, %s19, 1
          %s313 = smul.addr %s312, 8
          %s314 = scalar_lea.vmem %s0, %s313
        $region52: #{tpu_custom_call.1} parent=47 // pred_fallthru
          _
        // Predicated region
        $region53: #{tpu_custom_call.1} parent=47 // pred_check
          %p315 = pneg %p65
        $region54: #{tpu_custom_call.1} parent=47 // pred_check_branch
          %317 = sbr.rel (%p315) target = $region56
        $region55: #{tpu_custom_call.1} parent=47 // pred_region
          %p318 = scmp.lt.s32.totalorder %s19, 1
          %s319 = scalar_select %p318, %s19, 1
          %s320 = smul.addr %s319, 8
          %s321 = scalar_lea.vmem %s1, %s320
        $region56: #{tpu_custom_call.1} parent=47 // pred_fallthru
          _
      $region48: #{tpu_custom_call.1} parent=5 // pred_fallthru
        _
      %p322 = scmp.le.s32.totalorder 1, %s19
      %p323 = scmp.lt.s32.totalorder %s19, 3
      %p324 = pnand %p322, %p323
      %p325 = pneg %p324
      // Predicated region
      $region57: #{tpu_custom_call.1} parent=5 // pred_check
        _
      $region58: #{tpu_custom_call.1} parent=5 // pred_check_branch
        %327 = sbr.rel (%p324) target = $region60
      $region59: #{tpu_custom_call.1} parent=5 // pred_region
        %s328 = ssub.s32 %s19, 1
        %p329 = scmp.lt.s32.totalorder %s24, 1
        %s330 = scalar_select %p329, %s24, 1
        %s331 = smul.addr %s330, 8
        %s332 = scalar_lea.vmem %s0, %s331
        %p333 = pneg %p45
        %p334 = pneg %p42
        %p335 = scmp.lt.s32.totalorder %s24, 1
        %s336 = scalar_select %p335, %s24, 1
        %s337 = smul.addr %s336, 8
        %s338 = scalar_lea.vmem %s1, %s337
        %p339 = pneg %p71
        %p340 = pneg %p68
        %p341 = pneg %p92
        %p342 = pneg %p89
        %p343 = pneg %p113
        %p344 = pneg %p110
        %p345 = pneg %p134
        %p346 = pneg %p131
        %p347 = pneg %p155
        %p348 = pneg %p152
        %p349 = pneg %p176
        %p350 = pneg %p173
        %p351 = pneg %p197
        %p352 = pneg %p194
        %p353 = pneg %p218
        %p354 = pneg %p215
        %p355 = pneg %p239
        %p356 = pneg %p236
        %p357 = pneg %p265
        %p358 = pneg %p262
        %s359 = sand.u32 %s252, 1
        %s360 = scalar_lea.sflag [#allocation4], %s359
        %s361 = sand.u32 %s252, 1
        %s362 = smul.addr %s361, 8
        %s363 = scalar_lea.vmem [#allocation3], %s362
        %p364 = scmp.lt.s32.totalorder %s24, 1
        %s365 = scalar_select %p364, %s24, 1
        %s366 = smul.addr %s365, 8
        %s367 = scalar_lea.vmem %s0, %s366
        %p368 = scmp.lt.s32.totalorder %s24, 1
        %s369 = scalar_select %p368, %s24, 1
        %s370 = smul.addr %s369, 8
        %s371 = scalar_lea.vmem %s1, %s370
        %v373 = vld [vmem:[%s367] sm:$0xff]
        %v374 = vld [vmem:[%s371] sm:$0x3f]
        %vm375 = vcmask 261120
        %v376 = vsel %vm375, %v373, 0.0
        %377 = vadd.xlane.f32.xlu0 %v376
        %v378 = vpop.xlane.xlu0 %377
        %v379 = vrcp.pop 32.0
        %v380 = vmul.f32 %v378, %v379
        %v381 = vsub.f32 %v373, %v380
        %v382 = vmul.f32 %v381, %v381
        %v383 = vsel %vm375, %v382, 0.0
        %384 = vadd.xlane.f32.xlu0 %v383
        %v385 = vpop.xlane.xlu0 %384
        %v386 = vmul.f32 %v385, %v379
        %v387 = vadd.f32 %v386, 1e-06
        %v388 = vrsqrt.pop %v387
        %v389 = vmul.f32 %v381, %v388
        %v390 = vadd.f32 %v374, 1.0
        %v391 = vlaneseq
        %v392 = vshrl.u32 %v391, 7
        %v393 = vsub.s32 1, %v392
        %v394 = vrot.slane %v390, %v393
        %v395 = vmul.f32 %v389, %v394
        %v396 = vlaneseq
        %v397 = vshrl.u32 %v396, 7
        %v398 = vsub.s32 0, %v397
        %v399 = vrot.slane %v374, %v398
        %v400 = vadd.f32 %v395, %v399
        %v401 = vpack.c.bf16 %v400, %v400
        %v402 = vld [vmem:[%s2] sm:$0xf]
        %v403 = vld [vmem:[%s2 + $0x4] sm:$0xf]
        %v404 = vld [vmem:[%s2 + $0x8] sm:$0xf]
        %v405 = vld [vmem:[%s2 + $0xc] sm:$0xf]
        %v406 = vld [vmem:[%s3] sm:$0x1]
        %v408 = vlaneseq
        %v409 = vshrl.u32 %v408, 7
        %v410 = vsub.s32 0, %v409
        %v411 = vrot.slane %v406, %v410
        %v417 = vunpack.c.l.b16 %v402
        %v418 = vunpack.c.l.b16 %v403
        %v419 = vunpack.c.l.b16 %v404
        %v420 = vunpack.c.l.b16 %v405
        %v421 = vpack.c.b16 %v418, %v417
        %v422 = vpack.c.b16 %v420, %v419
        %v426 = vsel %vm375, %v401, 0
        %428 = vmatprep.subr.bf16.mxu0 0
        %429 = vmatpush1.bf16.msra.mxu0 %v421
        %430 = vmatprep.subr.bf16.mxu0 0
        %431 = vmatpush1.bf16.msra.mxu0 %v422
        %432 = vmatprep.subr.bf16.mxu0 0
        %433 = vmatpush1.bf16.msra.mxu0 0
        %434 = vmatprep.subr.bf16.mxu0 0
        %435 = vmatpush1.bf16.msra.mxu0 0
        %436 = vmatprep.subr.bf16.mxu0 0
        %437 = vmatpush1.bf16.msra.mxu0 0
        %438 = vmatprep.subr.bf16.mxu0 0
        %439 = vmatpush1.bf16.msra.mxu0 0
        %440 = vmatprep.subr.bf16.mxu0 0
        %441 = vmatpush1.bf16.msra.mxu0 0
        %442 = vmatprep.subr.bf16.mxu0 0
        %443 = vmatpush1.bf16.msra.mxu0 0
        %444 = vmatprep.subr.bf16.mxu0 0
        %445 = vmatpush1.bf16.msra.mxu0 0
        %446 = vmatprep.subr.bf16.mxu0 0
        %447 = vmatpush1.bf16.msra.mxu0 0
        %448 = vmatprep.subr.bf16.mxu0 0
        %449 = vmatpush1.bf16.msra.mxu0 0
        %450 = vmatprep.subr.bf16.mxu0 0
        %451 = vmatpush1.bf16.msra.mxu0 0
        %452 = vmatprep.subr.bf16.mxu0 0
        %453 = vmatpush1.bf16.msra.mxu0 0
        %454 = vmatprep.subr.bf16.mxu0 0
        %455 = vmatpush1.bf16.msra.mxu0 0
        %456 = vmatprep.subr.bf16.mxu0 0
        %457 = vmatpush1.bf16.msra.mxu0 0
        %458 = vmatprep.subr.bf16.mxu0 0
        %459 = vmatpush1.bf16.msra.mxu0 0
        %460 = vmatprep.mubr.bf16.mxu0 0
        %461 = vmatmul.mubr.bf16.gmra.mrb[0].mxu0 %v426
        %v462 = vpop.f32.mrb[0].mxu0
        %v463 = vadd.f32 %v411, %v462
        %v464 = vpop.f32.mrb[0].mxu0
        %v465 = vpop.f32.mrb[0].mxu0
        %v466 = vpop.f32.mrb[0].mxu0
        %467 = vdwg.mxu0
        %v468 = vpack.c.bf16 %v463, %v463
        %470 = vrot.lane.b32.xlu0 %v468, 96
        %v471 = vpop.permute.xlu0 %470
        %vm472 = vcmask 64512
        %v474 = vsel %vm472, %v468, 0
        %v477 = vsel %vm472, %v471, 0
        %479 = vmatprep.subr.bf16.mxu0 0
        %480 = vmatpush1.bf16.xpose.msra.mxu0 %v477
        %481 = vmatprep.subr.bf16.mxu0 0
        %482 = vmatpush1.bf16.xpose.msra.mxu0 0
        %483 = vmatprep.subr.bf16.mxu0 0
        %484 = vmatpush1.bf16.xpose.msra.mxu0 0
        %485 = vmatprep.subr.bf16.mxu0 0
        %486 = vmatpush1.bf16.xpose.msra.mxu0 0
        %487 = vmatprep.subr.bf16.mxu0 0
        %488 = vmatpush1.bf16.xpose.msra.mxu0 0
        %489 = vmatprep.subr.bf16.mxu0 0
        %490 = vmatpush1.bf16.xpose.msra.mxu0 0
        %491 = vmatprep.subr.bf16.mxu0 0
        %492 = vmatpush1.bf16.xpose.msra.mxu0 0
        %493 = vmatprep.subr.bf16.mxu0 0
        %494 = vmatpush1.bf16.xpose.msra.mxu0 0
        %495 = vmatprep.subr.bf16.mxu0 0
        %496 = vmatpush1.bf16.xpose.msra.mxu0 0
        %497 = vmatprep.subr.bf16.mxu0 0
        %498 = vmatpush1.bf16.xpose.msra.mxu0 0
        %499 = vmatprep.subr.bf16.mxu0 0
        %500 = vmatpush1.bf16.xpose.msra.mxu0 0
        %501 = vmatprep.subr.bf16.mxu0 0
        %502 = vmatpush1.bf16.xpose.msra.mxu0 0
        %503 = vmatprep.subr.bf16.mxu0 0
        %504 = vmatpush1.bf16.xpose.msra.mxu0 0
        %505 = vmatprep.subr.bf16.mxu0 0
        %506 = vmatpush1.bf16.xpose.msra.mxu0 0
        %507 = vmatprep.subr.bf16.mxu0 0
        %508 = vmatpush1.bf16.xpose.msra.mxu0 0
        %509 = vmatprep.subr.bf16.mxu0 0
        %510 = vmatpush1.bf16.xpose.msra.mxu0 0
        %511 = vmatprep.mubr.bf16.mxu0 0
        %512 = vmatmul.mubr.bf16.gmra.mrb[0].mxu0 %v474
        %v513 = vpop.f32.mrb[0].mxu0
        %v514 = vadd.f32 0.0, %v513
        %v515 = vpop.f32.mrb[0].mxu0
        %v516 = vpop.f32.mrb[0].mxu0
        %v517 = vpop.f32.mrb[0].mxu0
        %518 = vdwg.mxu0
        %v519 = vsel %vm472, %v514, -inf
        %520 = vmax.xlane.f32.xlu0 %v519
        %v521 = vpop.xlane.xlu0 %520
        %v522 = vsub.f32 %v514, %v521
        %v523 = vmul.f32 %v522, 1.442695
        %v524 = vpow.pop %v523
        %v525 = vsel %vm472, %v524, 0.0
        %526 = vadd.xlane.f32.xlu0 %v525
        %v527 = vpop.xlane.xlu0 %526
        %v528 = vpack.c.bf16 %v524, %v524
        %529 = vrot.lane.b32.xlu0 %v468, 64
        %v530 = vpop.permute.xlu0 %529
        %v532 = vsel %vm472, %v528, 0
        %vm534 = vcmask 1043456
        %v536 = vsel %vm534, %v530, 0
        %538 = vmatprep.subr.bf16.mxu0 0
        %539 = vmatpush1.bf16.msra.mxu0 %v536
        %540 = vmatprep.subr.bf16.mxu0 0
        %541 = vmatpush1.bf16.msra.mxu0 0
        %542 = vmatprep.subr.bf16.mxu0 0
        %543 = vmatpush1.bf16.msra.mxu0 0
        %544 = vmatprep.subr.bf16.mxu0 0
        %545 = vmatpush1.bf16.msra.mxu0 0
        %546 = vmatprep.subr.bf16.mxu0 0
        %547 = vmatpush1.bf16.msra.mxu0 0
        %548 = vmatprep.subr.bf16.mxu0 0
        %549 = vmatpush1.bf16.msra.mxu0 0
        %550 = vmatprep.subr.bf16.mxu0 0
        %551 = vmatpush1.bf16.msra.mxu0 0
        %552 = vmatprep.subr.bf16.mxu0 0
        %553 = vmatpush1.bf16.msra.mxu0 0
        %554 = vmatprep.subr.bf16.mxu0 0
        %555 = vmatpush1.bf16.msra.mxu0 0
        %556 = vmatprep.subr.bf16.mxu0 0
        %557 = vmatpush1.bf16.msra.mxu0 0
        %558 = vmatprep.subr.bf16.mxu0 0
        %559 = vmatpush1.bf16.msra.mxu0 0
        %560 = vmatprep.subr.bf16.mxu0 0
        %561 = vmatpush1.bf16.msra.mxu0 0
        %562 = vmatprep.subr.bf16.mxu0 0
        %563 = vmatpush1.bf16.msra.mxu0 0
        %564 = vmatprep.subr.bf16.mxu0 0
        %565 = vmatpush1.bf16.msra.mxu0 0
        %566 = vmatprep.subr.bf16.mxu0 0
        %567 = vmatpush1.bf16.msra.mxu0 0
        %568 = vmatprep.subr.bf16.mxu0 0
        %569 = vmatpush1.bf16.msra.mxu0 0
        %570 = vmatprep.mubr.bf16.mxu0 0
        %571 = vmatmul.mubr.bf16.gmra.mrb[0].mxu0 %v532
        %v572 = vpop.f32.mrb[0].mxu0
        %v573 = vadd.f32 0.0, %v572
        %v574 = vpop.f32.mrb[0].mxu0
        %v575 = vpop.f32.mrb[0].mxu0
        %v576 = vpop.f32.mrb[0].mxu0
        %577 = vdwg.mxu0
        %v578 = vrcp.pop %v527
        %v579 = vmul.f32 %v573, %v578
        %v580 = vpack.c.bf16 %v579, %v579
        %vm581 = vcmask 60416
        %582 = vst.msk [vmem:[#allocation2] sm:$0xf] %vm581, %v580
        %583 = vrot.lane.b32.xlu0 %v468, 120
        %v584 = vpop.permute.xlu0 %583
        %585 = vrot.lane.b32.xlu0 %v468, 88
        %v586 = vpop.permute.xlu0 %585
        %v588 = vsel %vm472, %v584, 0
        %v591 = vsel %vm472, %v586, 0
        %593 = vmatprep.subr.bf16.mxu0 0
        %594 = vmatpush1.bf16.xpose.msra.mxu0 %v591
        %595 = vmatprep.subr.bf16.mxu0 0
        %596 = vmatpush1.bf16.xpose.msra.mxu0 0
        %597 = vmatprep.subr.bf16.mxu0 0
        %598 = vmatpush1.bf16.xpose.msra.mxu0 0
        %599 = vmatprep.subr.bf16.mxu0 0
        %600 = vmatpush1.bf16.xpose.msra.mxu0 0
        %601 = vmatprep.subr.bf16.mxu0 0
        %602 = vmatpush1.bf16.xpose.msra.mxu0 0
        %603 = vmatprep.subr.bf16.mxu0 0
        %604 = vmatpush1.bf16.xpose.msra.mxu0 0
        %605 = vmatprep.subr.bf16.mxu0 0
        %606 = vmatpush1.bf16.xpose.msra.mxu0 0
        %607 = vmatprep.subr.bf16.mxu0 0
        %608 = vmatpush1.bf16.xpose.msra.mxu0 0
        %609 = vmatprep.subr.bf16.mxu0 0
        %610 = vmatpush1.bf16.xpose.msra.mxu0 0
        %611 = vmatprep.subr.bf16.mxu0 0
        %612 = vmatpush1.bf16.xpose.msra.mxu0 0
        %613 = vmatprep.subr.bf16.mxu0 0
        %614 = vmatpush1.bf16.xpose.msra.mxu0 0
        %615 = vmatprep.subr.bf16.mxu0 0
        %616 = vmatpush1.bf16.xpose.msra.mxu0 0
        %617 = vmatprep.subr.bf16.mxu0 0
        %618 = vmatpush1.bf16.xpose.msra.mxu0 0
        %619 = vmatprep.subr.bf16.mxu0 0
        %620 = vmatpush1.bf16.xpose.msra.mxu0 0
        %621 = vmatprep.subr.bf16.mxu0 0
        %622 = vmatpush1.bf16.xpose.msra.mxu0 0
        %623 = vmatprep.subr.bf16.mxu0 0
        %624 = vmatpush1.bf16.xpose.msra.mxu0 0
        %625 = vmatprep.mubr.bf16.mxu0 0
        %626 = vmatmul.mubr.bf16.gmra.mrb[0].mxu0 %v588
        %v627 = vpop.f32.mrb[0].mxu0
        %v628 = vadd.f32 0.0, %v627
        %v629 = vpop.f32.mrb[0].mxu0
        %v630 = vpop.f32.mrb[0].mxu0
        %v631 = vpop.f32.mrb[0].mxu0
        %632 = vdwg.mxu0
        %v633 = vsel %vm472, %v628, -inf
        %634 = vmax.xlane.f32.xlu0 %v633
        %v635 = vpop.xlane.xlu0 %634
        %v636 = vsub.f32 %v628, %v635
        %v637 = vmul.f32 %v636, 1.442695
        %v638 = vpow.pop %v637
        %v639 = vsel %vm472, %v638, 0.0
        %640 = vadd.xlane.f32.xlu0 %v639
        %v641 = vpop.xlane.xlu0 %640
        %v642 = vpack.c.bf16 %v638, %v638
        %643 = vrot.lane.b32.xlu0 %v468, 56
        %v644 = vpop.permute.xlu0 %643
        %v646 = vsel %vm472, %v642, 0
        %v649 = vsel %vm534, %v644, 0
        %651 = vmatprep.subr.bf16.mxu0 0
        %652 = vmatpush1.bf16.msra.mxu0 %v649
        %653 = vmatprep.subr.bf16.mxu0 0
        %654 = vmatpush1.bf16.msra.mxu0 0
        %655 = vmatprep.subr.bf16.mxu0 0
        %656 = vmatpush1.bf16.msra.mxu0 0
        %657 = vmatprep.subr.bf16.mxu0 0
        %658 = vmatpush1.bf16.msra.mxu0 0
        %659 = vmatprep.subr.bf16.mxu0 0
        %660 = vmatpush1.bf16.msra.mxu0 0
        %661 = vmatprep.subr.bf16.mxu0 0
        %662 = vmatpush1.bf16.msra.mxu0 0
        %663 = vmatprep.subr.bf16.mxu0 0
        %664 = vmatpush1.bf16.msra.mxu0 0
        %665 = vmatprep.subr.bf16.mxu0 0
        %666 = vmatpush1.bf16.msra.mxu0 0
        %667 = vmatprep.subr.bf16.mxu0 0
        %668 = vmatpush1.bf16.msra.mxu0 0
        %669 = vmatprep.subr.bf16.mxu0 0
        %670 = vmatpush1.bf16.msra.mxu0 0
        %671 = vmatprep.subr.bf16.mxu0 0
        %672 = vmatpush1.bf16.msra.mxu0 0
        %673 = vmatprep.subr.bf16.mxu0 0
        %674 = vmatpush1.bf16.msra.mxu0 0
        %675 = vmatprep.subr.bf16.mxu0 0
        %676 = vmatpush1.bf16.msra.mxu0 0
        %677 = vmatprep.subr.bf16.mxu0 0
        %678 = vmatpush1.bf16.msra.mxu0 0
        %679 = vmatprep.subr.bf16.mxu0 0
        %680 = vmatpush1.bf16.msra.mxu0 0
        %681 = vmatprep.subr.bf16.mxu0 0
        %682 = vmatpush1.bf16.msra.mxu0 0
        %683 = vmatprep.mubr.bf16.mxu0 0
        %684 = vmatmul.mubr.bf16.gmra.mrb[0].mxu0 %v646
        %v685 = vpop.f32.mrb[0].mxu0
        %v686 = vadd.f32 0.0, %v685
        %v687 = vpop.f32.mrb[0].mxu0
        %v688 = vpop.f32.mrb[0].mxu0
        %v689 = vpop.f32.mrb[0].mxu0
        %690 = vdwg.mxu0
        %v691 = vrcp.pop %v641
        %v692 = vmul.f32 %v686, %v691
        %v693 = vpack.c.bf16 %v692, %v692
        %v695 = vunpack.c.l.b16 %v693
        %v696 = vpack.c.b16 %v695, %v695
        %697 = vrot.lane.b32.xlu0 %v696, 8
        %v698 = vpop.permute.xlu0 %697
        %vm700 = vcmask 126016
        %701 = vst.msk [vmem:[#allocation2] sm:$0xf] %vm700, %v698
        %702 = vrot.lane.b32.xlu0 %v468, 112
        %v703 = vpop.permute.xlu0 %702
        %704 = vrot.lane.b32.xlu0 %v468, 80
        %v705 = vpop.permute.xlu0 %704
        %v707 = vsel %vm472, %v703, 0
        %v710 = vsel %vm472, %v705, 0
        %712 = vmatprep.subr.bf16.mxu0 0
        %713 = vmatpush1.bf16.xpose.msra.mxu0 %v710
        %714 = vmatprep.subr.bf16.mxu0 0
        %715 = vmatpush1.bf16.xpose.msra.mxu0 0
        %716 = vmatprep.subr.bf16.mxu0 0
        %717 = vmatpush1.bf16.xpose.msra.mxu0 0
        %718 = vmatprep.subr.bf16.mxu0 0
        %719 = vmatpush1.bf16.xpose.msra.mxu0 0
        %720 = vmatprep.subr.bf16.mxu0 0
        %721 = vmatpush1.bf16.xpose.msra.mxu0 0
        %722 = vmatprep.subr.bf16.mxu0 0
        %723 = vmatpush1.bf16.xpose.msra.mxu0 0
        %724 = vmatprep.subr.bf16.mxu0 0
        %725 = vmatpush1.bf16.xpose.msra.mxu0 0
        %726 = vmatprep.subr.bf16.mxu0 0
        %727 = vmatpush1.bf16.xpose.msra.mxu0 0
        %728 = vmatprep.subr.bf16.mxu0 0
        %729 = vmatpush1.bf16.xpose.msra.mxu0 0
        %730 = vmatprep.subr.bf16.mxu0 0
        %731 = vmatpush1.bf16.xpose.msra.mxu0 0
        %732 = vmatprep.subr.bf16.mxu0 0
        %733 = vmatpush1.bf16.xpose.msra.mxu0 0
        %734 = vmatprep.subr.bf16.mxu0 0
        %735 = vmatpush1.bf16.xpose.msra.mxu0 0
        %736 = vmatprep.subr.bf16.mxu0 0
        %737 = vmatpush1.bf16.xpose.msra.mxu0 0
        %738 = vmatprep.subr.bf16.mxu0 0
        %739 = vmatpush1.bf16.xpose.msra.mxu0 0
        %740 = vmatprep.subr.bf16.mxu0 0
        %741 = vmatpush1.bf16.xpose.msra.mxu0 0
        %742 = vmatprep.subr.bf16.mxu0 0
        %743 = vmatpush1.bf16.xpose.msra.mxu0 0
        %744 = vmatprep.mubr.bf16.mxu0 0
        %745 = vmatmul.mubr.bf16.gmra.mrb[0].mxu0 %v707
        %v746 = vpop.f32.mrb[0].mxu0
        %v747 = vadd.f32 0.0, %v746
        %v748 = vpop.f32.mrb[0].mxu0
        %v749 = vpop.f32.mrb[0].mxu0
        %v750 = vpop.f32.mrb[0].mxu0
        %751 = vdwg.mxu0
        %v752 = vsel %vm472, %v747, -inf
        %753 = vmax.xlane.f32.xlu0 %v752
        %v754 = vpop.xlane.xlu0 %753
        %v755 = vsub.f32 %v747, %v754
        %v756 = vmul.f32 %v755, 1.442695
        %v757 = vpow.pop %v756
        %v758 = vsel %vm472, %v757, 0.0
        %759 = vadd.xlane.f32.xlu0 %v758
        %v760 = vpop.xlane.xlu0 %759
        %v761 = vpack.c.bf16 %v757, %v757
        %762 = vrot.lane.b32.xlu0 %v468, 48
        %v763 = vpop.permute.xlu0 %762
        %v765 = vsel %vm472, %v761, 0
        %v768 = vsel %vm534, %v763, 0
        %770 = vmatprep.subr.bf16.mxu0 0
        %771 = vmatpush1.bf16.msra.mxu0 %v768
        %772 = vmatprep.subr.bf16.mxu0 0
        %773 = vmatpush1.bf16.msra.mxu0 0
        %774 = vmatprep.subr.bf16.mxu0 0
        %775 = vmatpush1.bf16.msra.mxu0 0
        %776 = vmatprep.subr.bf16.mxu0 0
        %777 = vmatpush1.bf16.msra.mxu0 0
        %778 = vmatprep.subr.bf16.mxu0 0
        %779 = vmatpush1.bf16.msra.mxu0 0
        %780 = vmatprep.subr.bf16.mxu0 0
        %781 = vmatpush1.bf16.msra.mxu0 0
        %782 = vmatprep.subr.bf16.mxu0 0
        %783 = vmatpush1.bf16.msra.mxu0 0
        %784 = vmatprep.subr.bf16.mxu0 0
        %785 = vmatpush1.bf16.msra.mxu0 0
        %786 = vmatprep.subr.bf16.mxu0 0
        %787 = vmatpush1.bf16.msra.mxu0 0
        %788 = vmatprep.subr.bf16.mxu0 0
        %789 = vmatpush1.bf16.msra.mxu0 0
        %790 = vmatprep.subr.bf16.mxu0 0
        %791 = vmatpush1.bf16.msra.mxu0 0
        %792 = vmatprep.subr.bf16.mxu0 0
        %793 = vmatpush1.bf16.msra.mxu0 0
        %794 = vmatprep.subr.bf16.mxu0 0
        %795 = vmatpush1.bf16.msra.mxu0 0
        %796 = vmatprep.subr.bf16.mxu0 0
        %797 = vmatpush1.bf16.msra.mxu0 0
        %798 = vmatprep.subr.bf16.mxu0 0
        %799 = vmatpush1.bf16.msra.mxu0 0
        %800 = vmatprep.subr.bf16.mxu0 0
        %801 = vmatpush1.bf16.msra.mxu0 0
        %802 = vmatprep.mubr.bf16.mxu0 0
        %803 = vmatmul.mubr.bf16.gmra.mrb[0].mxu0 %v765
        %v804 = vpop.f32.mrb[0].mxu0
        %v805 = vadd.f32 0.0, %v804
        %v806 = vpop.f32.mrb[0].mxu0
        %v807 = vpop.f32.mrb[0].mxu0
        %v808 = vpop.f32.mrb[0].mxu0
        %809 = vdwg.mxu0
        %v810 = vrcp.pop %v760
        %v811 = vmul.f32 %v805, %v810
        %v812 = vpack.c.bf16 %v811, %v811
        %v814 = vunpack.c.l.b16 %v812
        %v815 = vpack.c.b16 %v814, %v814
        %816 = vrot.lane.b32.xlu0 %v815, 16
        %v817 = vpop.permute.xlu0 %816
        %vm819 = vcmask 191616
        %820 = vst.msk [vmem:[#allocation2] sm:$0xf] %vm819, %v817
        %821 = vrot.lane.b32.xlu0 %v468, 104
        %v822 = vpop.permute.xlu0 %821
        %823 = vrot.lane.b32.xlu0 %v468, 72
        %v824 = vpop.permute.xlu0 %823
        %v826 = vsel %vm472, %v822, 0
        %v829 = vsel %vm472, %v824, 0
        %831 = vmatprep.subr.bf16.mxu0 0
        %832 = vmatpush1.bf16.xpose.msra.mxu0 %v829
        %833 = vmatprep.subr.bf16.mxu0 0
        %834 = vmatpush1.bf16.xpose.msra.mxu0 0
        %835 = vmatprep.subr.bf16.mxu0 0
        %836 = vmatpush1.bf16.xpose.msra.mxu0 0
        %837 = vmatprep.subr.bf16.mxu0 0
        %838 = vmatpush1.bf16.xpose.msra.mxu0 0
        %839 = vmatprep.subr.bf16.mxu0 0
        %840 = vmatpush1.bf16.xpose.msra.mxu0 0
        %841 = vmatprep.subr.bf16.mxu0 0
        %842 = vmatpush1.bf16.xpose.msra.mxu0 0
        %843 = vmatprep.subr.bf16.mxu0 0
        %844 = vmatpush1.bf16.xpose.msra.mxu0 0
        %845 = vmatprep.subr.bf16.mxu0 0
        %846 = vmatpush1.bf16.xpose.msra.mxu0 0
        %847 = vmatprep.subr.bf16.mxu0 0
        %848 = vmatpush1.bf16.xpose.msra.mxu0 0
        %849 = vmatprep.subr.bf16.mxu0 0
        %850 = vmatpush1.bf16.xpose.msra.mxu0 0
        %851 = vmatprep.subr.bf16.mxu0 0
        %852 = vmatpush1.bf16.xpose.msra.mxu0 0
        %853 = vmatprep.subr.bf16.mxu0 0
        %854 = vmatpush1.bf16.xpose.msra.mxu0 0
        %855 = vmatprep.subr.bf16.mxu0 0
        %856 = vmatpush1.bf16.xpose.msra.mxu0 0
        %857 = vmatprep.subr.bf16.mxu0 0
        %858 = vmatpush1.bf16.xpose.msra.mxu0 0
        %859 = vmatprep.subr.bf16.mxu0 0
        %860 = vmatpush1.bf16.xpose.msra.mxu0 0
        %861 = vmatprep.subr.bf16.mxu0 0
        %862 = vmatpush1.bf16.xpose.msra.mxu0 0
        %863 = vmatprep.mubr.bf16.mxu0 0
        %864 = vmatmul.mubr.bf16.gmra.mrb[0].mxu0 %v826
        %v865 = vpop.f32.mrb[0].mxu0
        %v866 = vadd.f32 0.0, %v865
        %v867 = vpop.f32.mrb[0].mxu0
        %v868 = vpop.f32.mrb[0].mxu0
        %v869 = vpop.f32.mrb[0].mxu0
        %870 = vdwg.mxu0
        %v871 = vsel %vm472, %v866, -inf
        %872 = vmax.xlane.f32.xlu0 %v871
        %v873 = vpop.xlane.xlu0 %872
        %v874 = vsub.f32 %v866, %v873
        %v875 = vmul.f32 %v874, 1.442695
        %v876 = vpow.pop %v875
        %v877 = vsel %vm472, %v876, 0.0
        %878 = vadd.xlane.f32.xlu0 %v877
        %v879 = vpop.xlane.xlu0 %878
        %v880 = vpack.c.bf16 %v876, %v876
        %881 = vrot.lane.b32.xlu0 %v468, 40
        %v882 = vpop.permute.xlu0 %881
        %v884 = vsel %vm472, %v880, 0
        %v887 = vsel %vm534, %v882, 0
        %889 = vmatprep.subr.bf16.mxu0 0
        %890 = vmatpush1.bf16.msra.mxu0 %v887
        %891 = vmatprep.subr.bf16.mxu0 0
        %892 = vmatpush1.bf16.msra.mxu0 0
        %893 = vmatprep.subr.bf16.mxu0 0
        %894 = vmatpush1.bf16.msra.mxu0 0
        %895 = vmatprep.subr.bf16.mxu0 0
        %896 = vmatpush1.bf16.msra.mxu0 0
        %897 = vmatprep.subr.bf16.mxu0 0
        %898 = vmatpush1.bf16.msra.mxu0 0
        %899 = vmatprep.subr.bf16.mxu0 0
        %900 = vmatpush1.bf16.msra.mxu0 0
        %901 = vmatprep.subr.bf16.mxu0 0
        %902 = vmatpush1.bf16.msra.mxu0 0
        %903 = vmatprep.subr.bf16.mxu0 0
        %904 = vmatpush1.bf16.msra.mxu0 0
        %905 = vmatprep.subr.bf16.mxu0 0
        %906 = vmatpush1.bf16.msra.mxu0 0
        %907 = vmatprep.subr.bf16.mxu0 0
        %908 = vmatpush1.bf16.msra.mxu0 0
        %909 = vmatprep.subr.bf16.mxu0 0
        %910 = vmatpush1.bf16.msra.mxu0 0
        %911 = vmatprep.subr.bf16.mxu0 0
        %912 = vmatpush1.bf16.msra.mxu0 0
        %913 = vmatprep.subr.bf16.mxu0 0
        %914 = vmatpush1.bf16.msra.mxu0 0
        %915 = vmatprep.subr.bf16.mxu0 0
        %916 = vmatpush1.bf16.msra.mxu0 0
        %917 = vmatprep.subr.bf16.mxu0 0
        %918 = vmatpush1.bf16.msra.mxu0 0
        %919 = vmatprep.subr.bf16.mxu0 0
        %920 = vmatpush1.bf16.msra.mxu0 0
        %921 = vmatprep.mubr.bf16.mxu0 0
        %922 = vmatmul.mubr.bf16.gmra.mrb[0].mxu0 %v884
        %v923 = vpop.f32.mrb[0].mxu0
        %v924 = vadd.f32 0.0, %v923
        %v925 = vpop.f32.mrb[0].mxu0
        %v926 = vpop.f32.mrb[0].mxu0
        %v927 = vpop.f32.mrb[0].mxu0
        %928 = vdwg.mxu0
        %v929 = vrcp.pop %v879
        %v930 = vmul.f32 %v924, %v929
        %v931 = vpack.c.bf16 %v930, %v930
        %v933 = vunpack.c.l.b16 %v931
        %v934 = vpack.c.b16 %v933, %v933
        %935 = vrot.lane.b32.xlu0 %v934, 24
        %v936 = vpop.permute.xlu0 %935
        %vm938 = vcmask 257216
        %939 = vst.msk [vmem:[#allocation2] sm:$0xf] %vm938, %v936
        %v940 = vld [vmem:[#allocation2] sm:$0xf]
        %v941 = vld [vmem:[%s4] sm:$0xf]
        %v942 = vld [vmem:[%s4 + $0x4] sm:$0xf]
        %v943 = vld [vmem:[%s4 + $0x8] sm:$0xf]
        %v944 = vld [vmem:[%s4 + $0xc] sm:$0xf]
        %v945 = vld [vmem:[%s5] sm:$0x1]
        %v947 = vlaneseq
        %v948 = vshrl.u32 %v947, 7
        %v949 = vsub.s32 0, %v948
        %v950 = vrot.slane %v945, %v949
        %v956 = vunpack.c.l.b16 %v941
        %v957 = vunpack.c.l.b16 %v942
        %v958 = vunpack.c.l.b16 %v943
        %v959 = vunpack.c.l.b16 %v944
        %v960 = vpack.c.b16 %v957, %v956
        %v961 = vpack.c.b16 %v959, %v958
        %v965 = vsel %vm375, %v940, 0
        %967 = vmatprep.subr.bf16.mxu0 0
        %968 = vmatpush1.bf16.msra.mxu0 %v960
        %969 = vmatprep.subr.bf16.mxu0 0
        %970 = vmatpush1.bf16.msra.mxu0 %v961
        %971 = vmatprep.subr.bf16.mxu0 0
        %972 = vmatpush1.bf16.msra.mxu0 0
        %973 = vmatprep.subr.bf16.mxu0 0
        %974 = vmatpush1.bf16.msra.mxu0 0
        %975 = vmatprep.subr.bf16.mxu0 0
        %976 = vmatpush1.bf16.msra.mxu0 0
        %977 = vmatprep.subr.bf16.mxu0 0
        %978 = vmatpush1.bf16.msra.mxu0 0
        %979 = vmatprep.subr.bf16.mxu0 0
        %980 = vmatpush1.bf16.msra.mxu0 0
        %981 = vmatprep.subr.bf16.mxu0 0
        %982 = vmatpush1.bf16.msra.mxu0 0
        %983 = vmatprep.subr.bf16.mxu0 0
        %984 = vmatpush1.bf16.msra.mxu0 0
        %985 = vmatprep.subr.bf16.mxu0 0
        %986 = vmatpush1.bf16.msra.mxu0 0
        %987 = vmatprep.subr.bf16.mxu0 0
        %988 = vmatpush1.bf16.msra.mxu0 0
        %989 = vmatprep.subr.bf16.mxu0 0
        %990 = vmatpush1.bf16.msra.mxu0 0
        %991 = vmatprep.subr.bf16.mxu0 0
        %992 = vmatpush1.bf16.msra.mxu0 0
        %993 = vmatprep.subr.bf16.mxu0 0
        %994 = vmatpush1.bf16.msra.mxu0 0
        %995 = vmatprep.subr.bf16.mxu0 0
        %996 = vmatpush1.bf16.msra.mxu0 0
        %997 = vmatprep.subr.bf16.mxu0 0
        %998 = vmatpush1.bf16.msra.mxu0 0
        %999 = vmatprep.mubr.bf16.mxu0 0
        %1000 = vmatmul.mubr.bf16.gmra.mrb[0].mxu0 %v965
        %v1001 = vpop.f32.mrb[0].mxu0
        %v1002 = vadd.f32 %v950, %v1001
        %v1003 = vpop.f32.mrb[0].mxu0
        %v1004 = vpop.f32.mrb[0].mxu0
        %v1005 = vpop.f32.mrb[0].mxu0
        %1006 = vdwg.mxu0
        %v1007 = vlaneseq
        %v1008 = vshrl.u32 %v1007, 7
        %v1009 = vsub.s32 2, %v1008
        %v1010 = vrot.slane %v374, %v1009
        %v1011 = vmul.f32 %v1010, %v1002
        %v1012 = vadd.f32 %v373, %v1011
        %v1013 = vsel %vm375, %v1012, 0.0
        %1014 = vadd.xlane.f32.xlu0 %v1013
        %v1015 = vpop.xlane.xlu0 %1014
        %v1016 = vmul.f32 %v1015, %v379
        %v1017 = vsub.f32 %v1012, %v1016
        %v1018 = vmul.f32 %v1017, %v1017
        %v1019 = vsel %vm375, %v1018, 0.0
        %1020 = vadd.xlane.f32.xlu0 %v1019
        %v1021 = vpop.xlane.xlu0 %1020
        %v1022 = vmul.f32 %v1021, %v379
        %v1023 = vadd.f32 %v1022, 1e-06
        %v1024 = vrsqrt.pop %v1023
        %v1025 = vmul.f32 %v1017, %v1024
        %v1026 = vlaneseq
        %v1027 = vshrl.u32 %v1026, 7
        %v1028 = vsub.s32 4, %v1027
        %v1029 = vrot.slane %v390, %v1028
        %v1030 = vmul.f32 %v1025, %v1029
        %v1031 = vlaneseq
        %v1032 = vshrl.u32 %v1031, 7
        %v1033 = vsub.s32 3, %v1032
        %v1034 = vrot.slane %v374, %v1033
        %v1035 = vadd.f32 %v1030, %v1034
        %v1036 = vpack.c.bf16 %v1035, %v1035
        %v1037 = vld [vmem:[%s6] sm:$0xf]
        %v1038 = vld [vmem:[%s6 + $0x4] sm:$0xf]
        %v1039 = vld [vmem:[%s6 + $0x8] sm:$0xf]
        %v1040 = vld [vmem:[%s6 + $0xc] sm:$0xf]
        %v1041 = vld [vmem:[%s7] sm:$0x1]
        %v1043 = vlaneseq
        %v1044 = vshrl.u32 %v1043, 7
        %v1045 = vsub.s32 0, %v1044
        %v1046 = vrot.slane %v1041, %v1045
        %v1052 = vunpack.c.l.b16 %v1037
        %v1053 = vunpack.c.l.b16 %v1038
        %v1054 = vunpack.c.l.b16 %v1039
        %v1055 = vunpack.c.l.b16 %v1040
        %v1056 = vpack.c.b16 %v1053, %v1052
        %v1057 = vpack.c.b16 %v1055, %v1054
        %v1061 = vsel %vm375, %v1036, 0
        %1063 = vmatprep.subr.bf16.mxu0 0
        %1064 = vmatpush1.bf16.msra.mxu0 %v1056
        %1065 = vmatprep.subr.bf16.mxu0 0
        %1066 = vmatpush1.bf16.msra.mxu0 %v1057
        %1067 = vmatprep.subr.bf16.mxu0 0
        %1068 = vmatpush1.bf16.msra.mxu0 0
        %1069 = vmatprep.subr.bf16.mxu0 0
        %1070 = vmatpush1.bf16.msra.mxu0 0
        %1071 = vmatprep.subr.bf16.mxu0 0
        %1072 = vmatpush1.bf16.msra.mxu0 0
        %1073 = vmatprep.subr.bf16.mxu0 0
        %1074 = vmatpush1.bf16.msra.mxu0 0
        %1075 = vmatprep.subr.bf16.mxu0 0
        %1076 = vmatpush1.bf16.msra.mxu0 0
        %1077 = vmatprep.subr.bf16.mxu0 0
        %1078 = vmatpush1.bf16.msra.mxu0 0
        %1079 = vmatprep.subr.bf16.mxu0 0
        %1080 = vmatpush1.bf16.msra.mxu0 0
        %1081 = vmatprep.subr.bf16.mxu0 0
        %1082 = vmatpush1.bf16.msra.mxu0 0
        %1083 = vmatprep.subr.bf16.mxu0 0
        %1084 = vmatpush1.bf16.msra.mxu0 0
        %1085 = vmatprep.subr.bf16.mxu0 0
        %1086 = vmatpush1.bf16.msra.mxu0 0
        %1087 = vmatprep.subr.bf16.mxu0 0
        %1088 = vmatpush1.bf16.msra.mxu0 0
        %1089 = vmatprep.subr.bf16.mxu0 0
        %1090 = vmatpush1.bf16.msra.mxu0 0
        %1091 = vmatprep.subr.bf16.mxu0 0
        %1092 = vmatpush1.bf16.msra.mxu0 0
        %1093 = vmatprep.subr.bf16.mxu0 0
        %1094 = vmatpush1.bf16.msra.mxu0 0
        %1095 = vmatprep.mubr.bf16.mxu0 0
        %1096 = vmatmul.mubr.bf16.gmra.mrb[0].mxu0 %v1061
        %v1097 = vpop.f32.mrb[0].mxu0
        %v1098 = vadd.f32 %v1046, %v1097
        %v1099 = vpop.f32.mrb[0].mxu0
        %v1100 = vpop.f32.mrb[0].mxu0
        %v1101 = vpop.f32.mrb[0].mxu0
        %1102 = vdwg.mxu0
        %v1103 = vmul.f32 %v1098, 0.5
        %v1104 = vmul.f32 %v1098, 0.044715
        %v1105 = vmul.f32 %v1104, %v1098
        %v1106 = vmul.f32 %v1105, %v1098
        %v1107 = vadd.f32 %v1098, %v1106
        %v1108 = vmul.f32 %v1107, 0.7978846
        %v1109 = vtanh.pop %v1108
        %v1110 = vadd.f32 %v1109, 1.0
        %v1111 = vmul.f32 %v1103, %v1110
        %v1112 = vpack.c.bf16 %v1111, %v1111
        %v1113 = vld [vmem:[%s8] sm:$0xf]
        %v1114 = vld [vmem:[%s8 + $0x4] sm:$0xf]
        %v1115 = vld [vmem:[%s8 + $0x8] sm:$0xf]
        %v1116 = vld [vmem:[%s8 + $0xc] sm:$0xf]
        %v1117 = vld [vmem:[%s8 + $0x10] sm:$0xf]
        %v1118 = vld [vmem:[%s8 + $0x14] sm:$0xf]
        %v1119 = vld [vmem:[%s8 + $0x18] sm:$0xf]
        %v1120 = vld [vmem:[%s8 + $0x1c] sm:$0xf]
        %v1121 = vld [vmem:[%s8 + $0x20] sm:$0xf]
        %v1122 = vld [vmem:[%s8 + $0x24] sm:$0xf]
        %v1123 = vld [vmem:[%s8 + $0x28] sm:$0xf]
        %v1124 = vld [vmem:[%s8 + $0x2c] sm:$0xf]
        %v1125 = vld [vmem:[%s8 + $0x30] sm:$0xf]
        %v1126 = vld [vmem:[%s8 + $0x34] sm:$0xf]
        %v1127 = vld [vmem:[%s8 + $0x38] sm:$0xf]
        %v1128 = vld [vmem:[%s8 + $0x3c] sm:$0xf]
        %v1129 = vld [vmem:[%s9] sm:$0x1]
        %v1131 = vlaneseq
        %v1132 = vshrl.u32 %v1131, 7
        %v1133 = vsub.s32 0, %v1132
        %v1134 = vrot.slane %v1129, %v1133
        %v1152 = vunpack.c.l.b16 %v1113
        %v1153 = vunpack.c.l.b16 %v1114
        %v1154 = vunpack.c.l.b16 %v1115
        %v1155 = vunpack.c.l.b16 %v1116
        %v1156 = vunpack.c.l.b16 %v1117
        %v1157 = vunpack.c.l.b16 %v1118
        %v1158 = vunpack.c.l.b16 %v1119
        %v1159 = vunpack.c.l.b16 %v1120
        %v1160 = vunpack.c.l.b16 %v1121
        %v1161 = vunpack.c.l.b16 %v1122
        %v1162 = vunpack.c.l.b16 %v1123
        %v1163 = vunpack.c.l.b16 %v1124
        %v1164 = vunpack.c.l.b16 %v1125
        %v1165 = vunpack.c.l.b16 %v1126
        %v1166 = vunpack.c.l.b16 %v1127
        %v1167 = vunpack.c.l.b16 %v1128
        %v1168 = vpack.c.b16 %v1153, %v1152
        %v1169 = vpack.c.b16 %v1155, %v1154
        %v1170 = vpack.c.b16 %v1157, %v1156
        %v1171 = vpack.c.b16 %v1159, %v1158
        %v1172 = vpack.c.b16 %v1161, %v1160
        %v1173 = vpack.c.b16 %v1163, %v1162
        %v1174 = vpack.c.b16 %v1165, %v1164
        %v1175 = vpack.c.b16 %v1167, %v1166
        %1184 = vmatprep.subr.bf16.mxu0 0
        %1185 = vmatpush1.bf16.msra.mxu0 %v1168
        %1186 = vmatprep.subr.bf16.mxu0 0
        %1187 = vmatpush1.bf16.msra.mxu0 %v1169
        %1188 = vmatprep.subr.bf16.mxu0 0
        %1189 = vmatpush1.bf16.msra.mxu0 %v1170
        %1190 = vmatprep.subr.bf16.mxu0 0
        %1191 = vmatpush1.bf16.msra.mxu0 %v1171
        %1192 = vmatprep.subr.bf16.mxu0 0
        %1193 = vmatpush1.bf16.msra.mxu0 %v1172
        %1194 = vmatprep.subr.bf16.mxu0 0
        %1195 = vmatpush1.bf16.msra.mxu0 %v1173
        %1196 = vmatprep.subr.bf16.mxu0 0
        %1197 = vmatpush1.bf16.msra.mxu0 %v1174
        %1198 = vmatprep.subr.bf16.mxu0 0
        %1199 = vmatpush1.bf16.msra.mxu0 %v1175
        %1200 = vmatprep.subr.bf16.mxu0 0
        %1201 = vmatpush1.bf16.msra.mxu0 0
        %1202 = vmatprep.subr.bf16.mxu0 0
        %1203 = vmatpush1.bf16.msra.mxu0 0
        %1204 = vmatprep.subr.bf16.mxu0 0
        %1205 = vmatpush1.bf16.msra.mxu0 0
        %1206 = vmatprep.subr.bf16.mxu0 0
        %1207 = vmatpush1.bf16.msra.mxu0 0
        %1208 = vmatprep.subr.bf16.mxu0 0
        %1209 = vmatpush1.bf16.msra.mxu0 0
        %1210 = vmatprep.subr.bf16.mxu0 0
        %1211 = vmatpush1.bf16.msra.mxu0 0
        %1212 = vmatprep.subr.bf16.mxu0 0
        %1213 = vmatpush1.bf16.msra.mxu0 0
        %1214 = vmatprep.subr.bf16.mxu0 0
        %1215 = vmatpush1.bf16.msra.mxu0 0
        %1216 = vmatprep.mubr.bf16.mxu0 0
        %1217 = vmatmul.mubr.bf16.gmra.mrb[0].mxu0 %v1112
        %v1218 = vpop.f32.mrb[0].mxu0
        %v1219 = vadd.f32 %v1134, %v1218
        %v1220 = vpop.f32.mrb[0].mxu0
        %v1221 = vpop.f32.mrb[0].mxu0
        %v1222 = vpop.f32.mrb[0].mxu0
        %1223 = vdwg.mxu0
        %v1224 = vlaneseq
        %v1225 = vshrl.u32 %v1224, 7
        %v1226 = vsub.s32 5, %v1225
        %v1227 = vrot.slane %v374, %v1226
        %v1228 = vmul.f32 %v1227, %v1219
        %v1229 = vadd.f32 %v1012, %v1228
        %1230 = vst.msk [vmem:[%s363] sm:$0xff] %vm375, %v1229
        %s1231 = sand.u32 %s252, 1
        %s1232 = scalar_lea.sflag [#allocation4], %s1231
        %s1233 = sand.u32 %s252, 1
        %s1234 = smul.addr %s1233, 8
        %s1235 = scalar_lea.vmem [#allocation3], %s1234
        // Predicated region
        $region61: #{tpu_custom_call.1} parent=59 // pred_check
          %p1236 = pneg %p262
        $region62: #{tpu_custom_call.1} parent=59 // pred_check_branch
          %1238 = sbr.rel (%p1236) target = $region64
        $region63: #{tpu_custom_call.1} parent=59 // pred_region
          %s1240 = ssub.s32 128, 128
          %1241 = vsyncadd %s1232, %s1240
          %s1242 = smul.addr %s24, 128
          %s1243 = scalar_lea.hbm %s10, %s1242
          %s1245 = sshll.u32 %s1235, 4
          %s1246 = int_to_ptr.vmem [resolvable:$true] %s1245
          %1248 = dma.vmem_to_hbm [thread:$0]  %s1246, 128, %s1243, %s1232
        $region64: #{tpu_custom_call.1} parent=59 // pred_fallthru
          _
      $region60: #{tpu_custom_call.1} parent=5 // pred_fallthru
        _
      %p1249 = scmp.le.s32.totalorder 2, %s19
      // Predicated region
      $region65: #{tpu_custom_call.1} parent=5 // pred_check
        %p1250 = pneg %p1249
      $region66: #{tpu_custom_call.1} parent=5 // pred_check_branch
        %1252 = sbr.rel (%p1250) target = $region68
      $region67: #{tpu_custom_call.1} parent=5 // pred_region
        %s1253 = ssub.s32 %s19, 2
        // Predicated region
        $region69: #{tpu_custom_call.1} parent=67 // pred_check
          %p1254 = pneg %p268
        $region70: #{tpu_custom_call.1} parent=67 // pred_check_branch
          %1256 = sbr.rel (%p1254) target = $region72
        $region71: #{tpu_custom_call.1} parent=67 // pred_region
          %s1257 = sand.u32 %s253, 1
          %s1258 = scalar_lea.sflag [#allocation4], %s1257
          %s1259 = sand.u32 %s253, 1
          %s1260 = smul.addr %s1259, 8
          %s1261 = scalar_lea.vmem [#allocation3], %s1260
          %1262 = dma.done %s1258, 128
        $region72: #{tpu_custom_call.1} parent=67 // pred_fallthru
          _
      $region68: #{tpu_custom_call.1} parent=5 // pred_fallthru
        _
    $region6: #{tpu_custom_call.1} parent=1 // loop_footer
      %s23 = sadd.s32 1, %s19
    $region7: #{tpu_custom_call.1} parent=1 // loop_footer_branch
      %18 = sbr.rel target = $region3
    $region8: #{tpu_custom_call.1} parent=1 // loop_exit
      _
    %1263 = vsyncpa [#allocation4], 1
    %s1264 = scalar_lea.sflag [#allocation4], 1
    %1265 = vsyncpa %s1264, 1

</llo_original>
